<compile_context>
chip_gen: v6e
topology: v6e:2x2x1
jax: 0.10.0
libtpu: 0.0.40
codegen_flags: <defaults>
</compile_context>

<pallas_src>
import functools

import jax
import jax.numpy as jnp
import numpy as np
from jax.experimental import pallas as pl
from jax.experimental.pallas import tpu as pltpu

# ----------------------------------------------------------------------------
# Assumed architecture constants
# ----------------------------------------------------------------------------
C_IN, C1, C2 = 4, 32, 64
KS, STRIDE, PAD = 4, 2, 1
H_IN = W_IN = 16
OH1 = OW1 = (H_IN + 2 * PAD - KS) // STRIDE + 1      # 8
OH2 = OW2 = (OH1 + 2 * PAD - KS) // STRIDE + 1       # 4
TAPS = KS * KS                                       # 16
K1 = TAPS * C_IN                                     # 64 (conv1 GEMM depth)
M1 = OH1 * OW1                                       # 64 conv1 rows / batch
M2 = OH2 * OW2                                       # 16 conv2 rows / batch
CPAD = 128                                           # lane-dense channel pad


# ----------------------------------------------------------------------------
# Fused per-batch-element kernel: conv1 + conv2 + linear + sigmoid
# ----------------------------------------------------------------------------
def _disc_fused_kernel(p1_ref, w1_ref, b1_ref, g_ref, w2_ref, b2_ref,
                       w3_ref, b3_ref, out_ref):
    # ---- conv1: im2col GEMM + bias + LeakyReLU(0.2); stays in registers ----
    y = jnp.dot(p1_ref[...], w1_ref[...], preferred_element_type=jnp.float32)
    y = y + b1_ref[...]                                       # f32 VPU math
    y1 = jnp.where(y > 0.0, y, 0.2 * y).astype(jnp.bfloat16)  # [64, 32]

    # ---- conv2: ONE selection GEMM implements the strided / zero-padded
    # patch gather of the 8x8 conv1 grid for all 16 taps at once (pure MXU,
    # M=256).  Cast to bf16 is lossless (rows of bf16 y1 or zeros). ----
    sel = jnp.dot(g_ref[...], y1, preferred_element_type=jnp.float32)
    sel = sel.astype(jnp.bfloat16)                            # [256, 32]

    # Per-tap [16,32] x [32,128] weight GEMMs, register accumulation
    # (no VMEM scratch, no zeros-init store).
    acc = jnp.zeros((M2, CPAD), jnp.float32)
    for t in range(TAPS):
        acc = acc + jnp.dot(sel[t * M2:(t + 1) * M2, :],
                            w2_ref[t * C1:(t + 1) * C1, :],
                            preferred_element_type=jnp.float32)
    y2 = acc + b2_ref[...]
    y2 = jnp.where(y2 > 0.0, y2, 0.2 * y2)                    # [16, 128] f32

    # ---- Linear(1024 -> 1) + Sigmoid: elementwise multiply with the
    # pre-permuted (NHWC-order) w3, then sublane + lane reduce.  No N=1 MXU
    # matmul, no f32 matmul. ----
    r = jnp.sum(y2 * w3_ref[...], axis=0, keepdims=True)      # [1, 128]
    logit = jnp.sum(r, axis=1, keepdims=True) + b3_ref[0]     # [1, 1]
    prob = pl.reciprocal(1.0 + jnp.exp(-logit), approx=True)  # [1, 1]
    out_ref[...] = jnp.broadcast_to(prob.reshape(1, 1, 1), out_ref.shape)


# ----------------------------------------------------------------------------
# conv1 im2col (pure reshape/slice work; runs inside the surrounding jit)
# ----------------------------------------------------------------------------
def _im2col(x_nhwc, kh, kw, stride, pad):
    x = jnp.pad(x_nhwc, ((0, 0), (pad, pad), (pad, pad), (0, 0)))
    n, hh, ww, c = x.shape
    oh = (hh - kh) // stride + 1
    ow = (ww - kw) // stride + 1
    patches = []
    for i in range(kh):
        for j in range(kw):
            patches.append(
                x[:, i:i + stride * oh:stride, j:j + stride * ow:stride, :])
    p = jnp.stack(patches, axis=3)          # [N, OH, OW, KH*KW, C]
    return p.reshape(n * oh * ow, kh * kw * c)


# ----------------------------------------------------------------------------
# One-time host-side parameter prep (all outputs are batch-independent)
# ----------------------------------------------------------------------------
def prepare_discriminator(params):
    # conv1 GEMM weight [K1, C1] = [64, 32] bf16 (no lane/K padding needed)
    w1g = np.transpose(np.asarray(params["w1"], np.float32),
                       (2, 3, 1, 0)).reshape(K1, C1)
    b1p = np.asarray(params["b1"], np.float32).reshape(1, C1)

    # conv2 selection matrix G: [TAPS*16, 64].  Row (t*16 + oh*4 + ow) selects
    # conv1 grid position (2*oh+i-1, 2*ow+j-1) for tap t=(i,j); zero rows
    # implement the conv padding.
    g = np.zeros((TAPS * M2, M1), np.float32)
    for i in range(KS):
        for j in range(KS):
            t = i * KS + j
            for oh in range(OH2):
                for ow in range(OW2):
                    h = STRIDE * oh + i - PAD
                    w = STRIDE * ow + j - PAD
                    if 0 <= h < OH1 and 0 <= w < OW1:
                        g[t * M2 + oh * OW2 + ow, h * OW1 + w] = 1.0

    # conv2 per-tap GEMM weights stacked along K: [TAPS*C1, 128] bf16
    w2_t = np.asarray(params["w2"], np.float32)            # [C2, C1, KS, KS]
    w2s = np.zeros((TAPS * C1, CPAD), np.float32)
    for i in range(KS):
        for j in range(KS):
            t = i * KS + j
            w2s[t * C1:(t + 1) * C1, :C2] = w2_t[:, :, i, j].T
    b2p = np.zeros((1, CPAD), np.float32)
    b2p[0, :C2] = np.asarray(params["b2"], np.float32)

    # Final linear: pre-permute from NCHW flatten order (c*16 + p) to the
    # NHWC (p, c) layout y2 has in-kernel, padded to 128 lanes.
    w3 = np.asarray(params["w3"], np.float32).reshape(C2, M2)   # [c, p]
    w3m = np.zeros((M2, CPAD), np.float32)
    w3m[:, :C2] = w3.T
    b3 = np.asarray(params["b3"], np.float32).reshape(1)

    return dict(
        w1g=jnp.asarray(w1g, jnp.bfloat16),
        b1p=jnp.asarray(b1p, jnp.float32),
        g=jnp.asarray(g, jnp.bfloat16),
        w2s=jnp.asarray(w2s, jnp.bfloat16),
        b2p=jnp.asarray(b2p, jnp.float32),
        w3m=jnp.asarray(w3m, jnp.float32),
        b3=jnp.asarray(b3, jnp.float32),
    )


# ----------------------------------------------------------------------------
# Forward (single jit: glue + pallas_call)
# ----------------------------------------------------------------------------
def _forward_impl(x_nchw, w1g, b1p, g, w2s, b2p, w3m, b3):
    n = x_nchw.shape[0]
    x = jnp.transpose(x_nchw, (0, 2, 3, 1)).astype(jnp.float32)   # NCHW->NHWC
    p1 = _im2col(x, KS, KS, STRIDE, PAD).astype(jnp.bfloat16)     # [n*64, 64]

    out = pl.pallas_call(
        _disc_fused_kernel,
        out_shape=jax.ShapeDtypeStruct((n, 1, CPAD), jnp.float32),
        grid=(n,),
        in_specs=[
            pl.BlockSpec((M1, K1), lambda b: (b, 0)),            # p1 patches
            pl.BlockSpec((K1, C1), lambda b: (0, 0)),            # w1
            pl.BlockSpec((1, C1), lambda b: (0, 0)),             # b1
            pl.BlockSpec((TAPS * M2, M1), lambda b: (0, 0)),     # G (gather)
            pl.BlockSpec((TAPS * C1, CPAD), lambda b: (0, 0)),   # w2 taps
            pl.BlockSpec((1, CPAD), lambda b: (0, 0)),           # b2
            pl.BlockSpec((M2, CPAD), lambda b: (0, 0)),          # w3 (NHWC)
            pl.BlockSpec(memory_space=pltpu.MemorySpace.SMEM),   # b3 scalar
        ],
        out_specs=pl.BlockSpec((1, 1, CPAD), lambda b: (b, 0, 0)),
        compiler_params=pltpu.CompilerParams(
            dimension_semantics=("parallel",)),
    )(p1, w1g, b1p, g, w2s, b2p, w3m, b3)
    return out[:, 0, :1]                                         # [N, 1]


_forward_jit = jax.jit(_forward_impl)


def discriminator_forward(ops, x_nchw):
    return _forward_jit(x_nchw, ops["w1g"], ops["b1p"], ops["g"],
                        ops["w2s"], ops["b2p"], ops["w3m"], ops["b3"])


# ----------------------------------------------------------------------------
# Params + pure-JAX reference (for self-check)
# ----------------------------------------------------------------------------
def init_params(key, in_ch=C_IN):
    k1, k2, k3, k4, k5, k6 = jax.random.split(key, 6)
    return {
        "w1": 0.02 * jax.random.normal(k1, (C1, in_ch, KS, KS), jnp.float32),
        "b1": 0.02 * jax.random.normal(k2, (C1,), jnp.float32),
        "w2": 0.02 * jax.random.normal(k3, (C2, C1, KS, KS), jnp.float32),
        "b2": 0.02 * jax.random.normal(k4, (C2,), jnp.float32),
        "w3": 0.02 * jax.random.normal(k5, (C2 * OH2 * OW2, 1), jnp.float32),
        "b3": 0.02 * jax.random.normal(k6, (1,), jnp.float32),
    }


def _reference_forward(params, x_nchw):
    def conv(x, w, b):
        y = jax.lax.conv_general_dilated(
            x, w, window_strides=(STRIDE, STRIDE),
            padding=((PAD, PAD), (PAD, PAD)),
            dimension_numbers=("NCHW", "OIHW", "NCHW"))
        return y + b.reshape(1, -1, 1, 1)

    lrelu = lambda v: jnp.where(v > 0, v, 0.2 * v)
    y1 = lrelu(conv(x_nchw.astype(jnp.float32), params["w1"], params["b1"]))
    y2 = lrelu(conv(y1, params["w2"], params["b2"]))
    flat = y2.reshape(y2.shape[0], -1)                  # NCHW flatten order
    return jax.nn.sigmoid(flat @ params["w3"] + params["b3"])


if __name__ == "__main__":
    key = jax.random.PRNGKey(0)
    kx, kp = jax.random.split(key)
    x = jax.random.normal(kx, (2, C_IN, H_IN, W_IN), jnp.float32)  # NCHW
    params = init_params(kp)

    ops = prepare_discriminator(params)
    out = jax.block_until_ready(discriminator_forward(ops, x))

    assert out.shape == (2, 1)
    assert bool(jnp.all(jnp.isfinite(out)))

    ref = _reference_forward(params, x)
    max_err = float(jnp.max(jnp.abs(out - ref)))
    assert max_err < 1e-2, f"mismatch vs reference: {max_err}"
    print("KERNEL_OK")
</pallas_src>

<mosaic_0001>
module attributes {stable_mosaic.version = 11 : i64} {
  func.func @_disc_fused_kernel(%arg0: i32, %arg1: memref<64x64xbf16, #tpu.memory_space<vmem>>, %arg2: memref<64x32xbf16, #tpu.memory_space<vmem>>, %arg3: memref<1x32xf32, #tpu.memory_space<vmem>>, %arg4: memref<256x64xbf16, #tpu.memory_space<vmem>>, %arg5: memref<512x128xbf16, #tpu.memory_space<vmem>>, %arg6: memref<1x128xf32, #tpu.memory_space<vmem>>, %arg7: memref<16x128xf32, #tpu.memory_space<vmem>>, %arg8: memref<1xf32, #tpu.memory_space<smem>>, %arg9: memref<1x1x128xf32, #tpu.memory_space<vmem>>) attributes {dimension_semantics = [#tpu.dimension_semantics<parallel>], iteration_bounds = array<i64: 2>, scalar_prefetch = 0 : i64, scratch_operands = 0 : i64, tpu.core_type = #tpu.core_type<tc>, window_params = [{transform_indices = @transform_0, window_bounds = array<i64: 64, 64>}, {pipeline_mode = #tpu.pipeline_mode<synchronous>, transform_indices = @transform_1, window_bounds = array<i64: 64, 32>}, {pipeline_mode = #tpu.pipeline_mode<synchronous>, transform_indices = @transform_2, window_bounds = array<i64: 1, 32>}, {pipeline_mode = #tpu.pipeline_mode<synchronous>, transform_indices = @transform_3, window_bounds = array<i64: 256, 64>}, {pipeline_mode = #tpu.pipeline_mode<synchronous>, transform_indices = @transform_4, window_bounds = array<i64: 512, 128>}, {pipeline_mode = #tpu.pipeline_mode<synchronous>, transform_indices = @transform_5, window_bounds = array<i64: 1, 128>}, {pipeline_mode = #tpu.pipeline_mode<synchronous>, transform_indices = @transform_6, window_bounds = array<i64: 16, 128>}, {transform_indices = @transform_7, window_bounds = array<i64: 1>}, {transform_indices = @transform_8, window_bounds = array<i64: 1, 1, 128>}]} {
    %c0 = arith.constant 0 : index
    %c0_0 = arith.constant 0 : index
    %0 = vector.load %arg1[%c0, %c0_0] : memref<64x64xbf16, #tpu.memory_space<vmem>>, vector<64x64xbf16>
    %c0_1 = arith.constant 0 : index
    %c0_2 = arith.constant 0 : index
    %1 = vector.load %arg2[%c0_1, %c0_2] : memref<64x32xbf16, #tpu.memory_space<vmem>>, vector<64x32xbf16>
    %cst = arith.constant dense<0.000000e+00> : vector<64x32xf32>
    %2 = tpu.matmul %0, %1, %cst {dimension_numbers = #tpu.dot_dimension_numbers<[1], [0], [0], [1], [0, 0, 1, 1], [], []>} : vector<64x64xbf16>, vector<64x32xbf16>, vector<64x32xf32> -> vector<64x32xf32>
    %c0_3 = arith.constant 0 : index
    %c0_4 = arith.constant 0 : index
    %3 = vector.load %arg3[%c0_3, %c0_4] : memref<1x32xf32, #tpu.memory_space<vmem>>, vector<1x32xf32>
    %4 = vector.broadcast %3 : vector<1x32xf32> to vector<64x32xf32>
    %5 = arith.addf %2, %4 : vector<64x32xf32>
    %cst_5 = arith.constant 0.000000e+00 : f32
    %6 = vector.broadcast %cst_5 : f32 to vector<64x32xf32>
    %7 = arith.cmpf ogt, %5, %6 : vector<64x32xf32>
    %cst_6 = arith.constant 2.000000e-01 : f32
    %8 = vector.broadcast %cst_6 : f32 to vector<64x32xf32>
    %9 = arith.mulf %8, %5 : vector<64x32xf32>
    %10 = arith.select %7, %5, %9 : vector<64x32xi1>, vector<64x32xf32>
    %11 = arith.truncf %10 : vector<64x32xf32> to vector<64x32xbf16>
    %c0_7 = arith.constant 0 : index
    %c0_8 = arith.constant 0 : index
    %12 = vector.load %arg4[%c0_7, %c0_8] : memref<256x64xbf16, #tpu.memory_space<vmem>>, vector<256x64xbf16>
    %cst_9 = arith.constant dense<0.000000e+00> : vector<256x32xf32>
    %13 = tpu.matmul %12, %11, %cst_9 {dimension_numbers = #tpu.dot_dimension_numbers<[1], [0], [0], [1], [0, 0, 1, 1], [], []>} : vector<256x64xbf16>, vector<64x32xbf16>, vector<256x32xf32> -> vector<256x32xf32>
    %14 = arith.truncf %13 : vector<256x32xf32> to vector<256x32xbf16>
    %cst_10 = arith.constant 0.000000e+00 : f32
    %15 = vector.broadcast %cst_10 : f32 to vector<16x128xf32>
    %16 = vector.extract_strided_slice %14 {offsets = [0, 0], sizes = [16, 32], strides = [1, 1]} : vector<256x32xbf16> to vector<16x32xbf16>
    %c0_11 = arith.constant 0 : index
    %c0_12 = arith.constant 0 : index
    %17 = vector.load %arg5[%c0_11, %c0_12] : memref<512x128xbf16, #tpu.memory_space<vmem>>, vector<32x128xbf16>
    %cst_13 = arith.constant dense<0.000000e+00> : vector<16x128xf32>
    %18 = tpu.matmul %16, %17, %cst_13 {dimension_numbers = #tpu.dot_dimension_numbers<[1], [0], [0], [1], [0, 0, 1, 1], [], []>} : vector<16x32xbf16>, vector<32x128xbf16>, vector<16x128xf32> -> vector<16x128xf32>
    %19 = arith.addf %15, %18 : vector<16x128xf32>
    %20 = vector.extract_strided_slice %14 {offsets = [16, 0], sizes = [16, 32], strides = [1, 1]} : vector<256x32xbf16> to vector<16x32xbf16>
    %c32 = arith.constant 32 : index
    %c0_14 = arith.constant 0 : index
    %21 = vector.load %arg5[%c32, %c0_14] : memref<512x128xbf16, #tpu.memory_space<vmem>>, vector<32x128xbf16>
    %cst_15 = arith.constant dense<0.000000e+00> : vector<16x128xf32>
    %22 = tpu.matmul %20, %21, %cst_15 {dimension_numbers = #tpu.dot_dimension_numbers<[1], [0], [0], [1], [0, 0, 1, 1], [], []>} : vector<16x32xbf16>, vector<32x128xbf16>, vector<16x128xf32> -> vector<16x128xf32>
    %23 = arith.addf %19, %22 : vector<16x128xf32>
    %24 = vector.extract_strided_slice %14 {offsets = [32, 0], sizes = [16, 32], strides = [1, 1]} : vector<256x32xbf16> to vector<16x32xbf16>
    %c64 = arith.constant 64 : index
    %c0_16 = arith.constant 0 : index
    %25 = vector.load %arg5[%c64, %c0_16] : memref<512x128xbf16, #tpu.memory_space<vmem>>, vector<32x128xbf16>
    %cst_17 = arith.constant dense<0.000000e+00> : vector<16x128xf32>
    %26 = tpu.matmul %24, %25, %cst_17 {dimension_numbers = #tpu.dot_dimension_numbers<[1], [0], [0], [1], [0, 0, 1, 1], [], []>} : vector<16x32xbf16>, vector<32x128xbf16>, vector<16x128xf32> -> vector<16x128xf32>
    %27 = arith.addf %23, %26 : vector<16x128xf32>
    %28 = vector.extract_strided_slice %14 {offsets = [48, 0], sizes = [16, 32], strides = [1, 1]} : vector<256x32xbf16> to vector<16x32xbf16>
    %c96 = arith.constant 96 : index
    %c0_18 = arith.constant 0 : index
    %29 = vector.load %arg5[%c96, %c0_18] : memref<512x128xbf16, #tpu.memory_space<vmem>>, vector<32x128xbf16>
    %cst_19 = arith.constant dense<0.000000e+00> : vector<16x128xf32>
    %30 = tpu.matmul %28, %29, %cst_19 {dimension_numbers = #tpu.dot_dimension_numbers<[1], [0], [0], [1], [0, 0, 1, 1], [], []>} : vector<16x32xbf16>, vector<32x128xbf16>, vector<16x128xf32> -> vector<16x128xf32>
    %31 = arith.addf %27, %30 : vector<16x128xf32>
    %32 = vector.extract_strided_slice %14 {offsets = [64, 0], sizes = [16, 32], strides = [1, 1]} : vector<256x32xbf16> to vector<16x32xbf16>
    %c128 = arith.constant 128 : index
    %c0_20 = arith.constant 0 : index
    %33 = vector.load %arg5[%c128, %c0_20] : memref<512x128xbf16, #tpu.memory_space<vmem>>, vector<32x128xbf16>
    %cst_21 = arith.constant dense<0.000000e+00> : vector<16x128xf32>
    %34 = tpu.matmul %32, %33, %cst_21 {dimension_numbers = #tpu.dot_dimension_numbers<[1], [0], [0], [1], [0, 0, 1, 1], [], []>} : vector<16x32xbf16>, vector<32x128xbf16>, vector<16x128xf32> -> vector<16x128xf32>
    %35 = arith.addf %31, %34 : vector<16x128xf32>
    %36 = vector.extract_strided_slice %14 {offsets = [80, 0], sizes = [16, 32], strides = [1, 1]} : vector<256x32xbf16> to vector<16x32xbf16>
    %c160 = arith.constant 160 : index
    %c0_22 = arith.constant 0 : index
    %37 = vector.load %arg5[%c160, %c0_22] : memref<512x128xbf16, #tpu.memory_space<vmem>>, vector<32x128xbf16>
    %cst_23 = arith.constant dense<0.000000e+00> : vector<16x128xf32>
    %38 = tpu.matmul %36, %37, %cst_23 {dimension_numbers = #tpu.dot_dimension_numbers<[1], [0], [0], [1], [0, 0, 1, 1], [], []>} : vector<16x32xbf16>, vector<32x128xbf16>, vector<16x128xf32> -> vector<16x128xf32>
    %39 = arith.addf %35, %38 : vector<16x128xf32>
    %40 = vector.extract_strided_slice %14 {offsets = [96, 0], sizes = [16, 32], strides = [1, 1]} : vector<256x32xbf16> to vector<16x32xbf16>
    %c192 = arith.constant 192 : index
    %c0_24 = arith.constant 0 : index
    %41 = vector.load %arg5[%c192, %c0_24] : memref<512x128xbf16, #tpu.memory_space<vmem>>, vector<32x128xbf16>
    %cst_25 = arith.constant dense<0.000000e+00> : vector<16x128xf32>
    %42 = tpu.matmul %40, %41, %cst_25 {dimension_numbers = #tpu.dot_dimension_numbers<[1], [0], [0], [1], [0, 0, 1, 1], [], []>} : vector<16x32xbf16>, vector<32x128xbf16>, vector<16x128xf32> -> vector<16x128xf32>
    %43 = arith.addf %39, %42 : vector<16x128xf32>
    %44 = vector.extract_strided_slice %14 {offsets = [112, 0], sizes = [16, 32], strides = [1, 1]} : vector<256x32xbf16> to vector<16x32xbf16>
    %c224 = arith.constant 224 : index
    %c0_26 = arith.constant 0 : index
    %45 = vector.load %arg5[%c224, %c0_26] : memref<512x128xbf16, #tpu.memory_space<vmem>>, vector<32x128xbf16>
    %cst_27 = arith.constant dense<0.000000e+00> : vector<16x128xf32>
    %46 = tpu.matmul %44, %45, %cst_27 {dimension_numbers = #tpu.dot_dimension_numbers<[1], [0], [0], [1], [0, 0, 1, 1], [], []>} : vector<16x32xbf16>, vector<32x128xbf16>, vector<16x128xf32> -> vector<16x128xf32>
    %47 = arith.addf %43, %46 : vector<16x128xf32>
    %48 = vector.extract_strided_slice %14 {offsets = [128, 0], sizes = [16, 32], strides = [1, 1]} : vector<256x32xbf16> to vector<16x32xbf16>
    %c256 = arith.constant 256 : index
    %c0_28 = arith.constant 0 : index
    %49 = vector.load %arg5[%c256, %c0_28] : memref<512x128xbf16, #tpu.memory_space<vmem>>, vector<32x128xbf16>
    %cst_29 = arith.constant dense<0.000000e+00> : vector<16x128xf32>
    %50 = tpu.matmul %48, %49, %cst_29 {dimension_numbers = #tpu.dot_dimension_numbers<[1], [0], [0], [1], [0, 0, 1, 1], [], []>} : vector<16x32xbf16>, vector<32x128xbf16>, vector<16x128xf32> -> vector<16x128xf32>
    %51 = arith.addf %47, %50 : vector<16x128xf32>
    %52 = vector.extract_strided_slice %14 {offsets = [144, 0], sizes = [16, 32], strides = [1, 1]} : vector<256x32xbf16> to vector<16x32xbf16>
    %c288 = arith.constant 288 : index
    %c0_30 = arith.constant 0 : index
    %53 = vector.load %arg5[%c288, %c0_30] : memref<512x128xbf16, #tpu.memory_space<vmem>>, vector<32x128xbf16>
    %cst_31 = arith.constant dense<0.000000e+00> : vector<16x128xf32>
    %54 = tpu.matmul %52, %53, %cst_31 {dimension_numbers = #tpu.dot_dimension_numbers<[1], [0], [0], [1], [0, 0, 1, 1], [], []>} : vector<16x32xbf16>, vector<32x128xbf16>, vector<16x128xf32> -> vector<16x128xf32>
    %55 = arith.addf %51, %54 : vector<16x128xf32>
    %56 = vector.extract_strided_slice %14 {offsets = [160, 0], sizes = [16, 32], strides = [1, 1]} : vector<256x32xbf16> to vector<16x32xbf16>
    %c320 = arith.constant 320 : index
    %c0_32 = arith.constant 0 : index
    %57 = vector.load %arg5[%c320, %c0_32] : memref<512x128xbf16, #tpu.memory_space<vmem>>, vector<32x128xbf16>
    %cst_33 = arith.constant dense<0.000000e+00> : vector<16x128xf32>
    %58 = tpu.matmul %56, %57, %cst_33 {dimension_numbers = #tpu.dot_dimension_numbers<[1], [0], [0], [1], [0, 0, 1, 1], [], []>} : vector<16x32xbf16>, vector<32x128xbf16>, vector<16x128xf32> -> vector<16x128xf32>
    %59 = arith.addf %55, %58 : vector<16x128xf32>
    %60 = vector.extract_strided_slice %14 {offsets = [176, 0], sizes = [16, 32], strides = [1, 1]} : vector<256x32xbf16> to vector<16x32xbf16>
    %c352 = arith.constant 352 : index
    %c0_34 = arith.constant 0 : index
    %61 = vector.load %arg5[%c352, %c0_34] : memref<512x128xbf16, #tpu.memory_space<vmem>>, vector<32x128xbf16>
    %cst_35 = arith.constant dense<0.000000e+00> : vector<16x128xf32>
    %62 = tpu.matmul %60, %61, %cst_35 {dimension_numbers = #tpu.dot_dimension_numbers<[1], [0], [0], [1], [0, 0, 1, 1], [], []>} : vector<16x32xbf16>, vector<32x128xbf16>, vector<16x128xf32> -> vector<16x128xf32>
    %63 = arith.addf %59, %62 : vector<16x128xf32>
    %64 = vector.extract_strided_slice %14 {offsets = [192, 0], sizes = [16, 32], strides = [1, 1]} : vector<256x32xbf16> to vector<16x32xbf16>
    %c384 = arith.constant 384 : index
    %c0_36 = arith.constant 0 : index
    %65 = vector.load %arg5[%c384, %c0_36] : memref<512x128xbf16, #tpu.memory_space<vmem>>, vector<32x128xbf16>
    %cst_37 = arith.constant dense<0.000000e+00> : vector<16x128xf32>
    %66 = tpu.matmul %64, %65, %cst_37 {dimension_numbers = #tpu.dot_dimension_numbers<[1], [0], [0], [1], [0, 0, 1, 1], [], []>} : vector<16x32xbf16>, vector<32x128xbf16>, vector<16x128xf32> -> vector<16x128xf32>
    %67 = arith.addf %63, %66 : vector<16x128xf32>
    %68 = vector.extract_strided_slice %14 {offsets = [208, 0], sizes = [16, 32], strides = [1, 1]} : vector<256x32xbf16> to vector<16x32xbf16>
    %c416 = arith.constant 416 : index
    %c0_38 = arith.constant 0 : index
    %69 = vector.load %arg5[%c416, %c0_38] : memref<512x128xbf16, #tpu.memory_space<vmem>>, vector<32x128xbf16>
    %cst_39 = arith.constant dense<0.000000e+00> : vector<16x128xf32>
    %70 = tpu.matmul %68, %69, %cst_39 {dimension_numbers = #tpu.dot_dimension_numbers<[1], [0], [0], [1], [0, 0, 1, 1], [], []>} : vector<16x32xbf16>, vector<32x128xbf16>, vector<16x128xf32> -> vector<16x128xf32>
    %71 = arith.addf %67, %70 : vector<16x128xf32>
    %72 = vector.extract_strided_slice %14 {offsets = [224, 0], sizes = [16, 32], strides = [1, 1]} : vector<256x32xbf16> to vector<16x32xbf16>
    %c448 = arith.constant 448 : index
    %c0_40 = arith.constant 0 : index
    %73 = vector.load %arg5[%c448, %c0_40] : memref<512x128xbf16, #tpu.memory_space<vmem>>, vector<32x128xbf16>
    %cst_41 = arith.constant dense<0.000000e+00> : vector<16x128xf32>
    %74 = tpu.matmul %72, %73, %cst_41 {dimension_numbers = #tpu.dot_dimension_numbers<[1], [0], [0], [1], [0, 0, 1, 1], [], []>} : vector<16x32xbf16>, vector<32x128xbf16>, vector<16x128xf32> -> vector<16x128xf32>
    %75 = arith.addf %71, %74 : vector<16x128xf32>
    %76 = vector.extract_strided_slice %14 {offsets = [240, 0], sizes = [16, 32], strides = [1, 1]} : vector<256x32xbf16> to vector<16x32xbf16>
    %c480 = arith.constant 480 : index
    %c0_42 = arith.constant 0 : index
    %77 = vector.load %arg5[%c480, %c0_42] : memref<512x128xbf16, #tpu.memory_space<vmem>>, vector<32x128xbf16>
    %cst_43 = arith.constant dense<0.000000e+00> : vector<16x128xf32>
    %78 = tpu.matmul %76, %77, %cst_43 {dimension_numbers = #tpu.dot_dimension_numbers<[1], [0], [0], [1], [0, 0, 1, 1], [], []>} : vector<16x32xbf16>, vector<32x128xbf16>, vector<16x128xf32> -> vector<16x128xf32>
    %79 = arith.addf %75, %78 : vector<16x128xf32>
    %c0_44 = arith.constant 0 : index
    %c0_45 = arith.constant 0 : index
    %80 = vector.load %arg6[%c0_44, %c0_45] : memref<1x128xf32, #tpu.memory_space<vmem>>, vector<1x128xf32>
    %81 = vector.broadcast %80 : vector<1x128xf32> to vector<16x128xf32>
    %82 = arith.addf %79, %81 : vector<16x128xf32>
    %cst_46 = arith.constant 0.000000e+00 : f32
    %83 = vector.broadcast %cst_46 : f32 to vector<16x128xf32>
    %84 = arith.cmpf ogt, %82, %83 : vector<16x128xf32>
    %cst_47 = arith.constant 2.000000e-01 : f32
    %85 = vector.broadcast %cst_47 : f32 to vector<16x128xf32>
    %86 = arith.mulf %85, %82 : vector<16x128xf32>
    %87 = arith.select %84, %82, %86 : vector<16x128xi1>, vector<16x128xf32>
    %c0_48 = arith.constant 0 : index
    %c0_49 = arith.constant 0 : index
    %88 = vector.load %arg7[%c0_48, %c0_49] : memref<16x128xf32, #tpu.memory_space<vmem>>, vector<16x128xf32>
    %89 = arith.mulf %87, %88 : vector<16x128xf32>
    %cst_50 = arith.constant dense<0.000000e+00> : vector<128xf32>
    %90 = vector.multi_reduction <add>, %89, %cst_50 [0] : vector<16x128xf32> to vector<128xf32>
    %91 = vector.shape_cast %90 : vector<128xf32> to vector<1x128xf32>
    %cst_51 = arith.constant dense<0.000000e+00> : vector<1xf32>
    %92 = vector.multi_reduction <add>, %91, %cst_51 [1] : vector<1x128xf32> to vector<1xf32>
    %93 = vector.shape_cast %92 : vector<1xf32> to vector<1x1xf32>
    %c0_52 = arith.constant 0 : index
    %94 = memref.load %arg8[%c0_52] : memref<1xf32, #tpu.memory_space<smem>>
    %95 = vector.broadcast %94 : f32 to vector<1x1xf32>
    %96 = arith.addf %93, %95 : vector<1x1xf32>
    %cst_53 = arith.constant 0.000000e+00 : f32
    %97 = vector.broadcast %cst_53 : f32 to vector<1x1xf32>
    %98 = arith.subf %97, %96 : vector<1x1xf32>
    %99 = math.exp %98 : vector<1x1xf32>
    %cst_54 = arith.constant 1.000000e+00 : f32
    %100 = vector.broadcast %cst_54 : f32 to vector<1x1xf32>
    %101 = arith.addf %100, %99 : vector<1x1xf32>
    %102 = tpu.reciprocal %101 {approx = true} : vector<1x1xf32> -> vector<1x1xf32>
    %103 = vector.shape_cast %102 : vector<1x1xf32> to vector<1x1x1xf32>
    %104 = vector.shape_cast %103 : vector<1x1x1xf32> to vector<1x1x1xf32>
    %105 = vector.broadcast %104 : vector<1x1x1xf32> to vector<1x1x128xf32>
    %c0_55 = arith.constant 0 : index
    %c0_56 = arith.constant 0 : index
    %c0_57 = arith.constant 0 : index
    %106 = vector.load %arg9[%c0_55, %c0_56, %c0_57] : memref<1x1x128xf32, #tpu.memory_space<vmem>>, vector<1x1x128xf32>
    tpu.vector_store %arg9[%c0_55, %c0_56, %c0_57], %105 {strides = array<i32>} : memref<1x1x128xf32, #tpu.memory_space<vmem>>, vector<1x1x128xf32>,
    return
  }
  func.func @transform_0(%arg0: i32) -> (i32, i32) {
    %c0_i32 = arith.constant 0 : i32
    %c0_i32_0 = arith.constant 0 : i32
    return %arg0, %c0_i32 : i32, i32
  }
  func.func @transform_1(%arg0: i32) -> (i32, i32) {
    %c0_i32 = arith.constant 0 : i32
    %c0_i32_0 = arith.constant 0 : i32
    %c0_i32_1 = arith.constant 0 : i32
    return %c0_i32, %c0_i32_0 : i32, i32
  }
  func.func @transform_2(%arg0: i32) -> (i32, i32) {
    %c0_i32 = arith.constant 0 : i32
    %c0_i32_0 = arith.constant 0 : i32
    %c0_i32_1 = arith.constant 0 : i32
    return %c0_i32, %c0_i32_0 : i32, i32
  }
  func.func @transform_3(%arg0: i32) -> (i32, i32) {
    %c0_i32 = arith.constant 0 : i32
    %c0_i32_0 = arith.constant 0 : i32
    %c0_i32_1 = arith.constant 0 : i32
    return %c0_i32, %c0_i32_0 : i32, i32
  }
  func.func @transform_4(%arg0: i32) -> (i32, i32) {
    %c0_i32 = arith.constant 0 : i32
    %c0_i32_0 = arith.constant 0 : i32
    %c0_i32_1 = arith.constant 0 : i32
    return %c0_i32, %c0_i32_0 : i32, i32
  }
  func.func @transform_5(%arg0: i32) -> (i32, i32) {
    %c0_i32 = arith.constant 0 : i32
    %c0_i32_0 = arith.constant 0 : i32
    %c0_i32_1 = arith.constant 0 : i32
    return %c0_i32, %c0_i32_0 : i32, i32
  }
  func.func @transform_6(%arg0: i32) -> (i32, i32) {
    %c0_i32 = arith.constant 0 : i32
    %c0_i32_0 = arith.constant 0 : i32
    %c0_i32_1 = arith.constant 0 : i32
    return %c0_i32, %c0_i32_0 : i32, i32
  }
  func.func @transform_7(%arg0: i32) -> i32 {
    %c0_i32 = arith.constant 0 : i32
    %c0_i32_0 = arith.constant 0 : i32
    return %c0_i32 : i32
  }
  func.func @transform_8(%arg0: i32) -> (i32, i32, i32) {
    %c0_i32 = arith.constant 0 : i32
    %c0_i32_0 = arith.constant 0 : i32
    %c0_i32_1 = arith.constant 0 : i32
    return %arg0, %c0_i32, %c0_i32_0 : i32, i32, i32
  }
}

</mosaic_0001>

<llo_original>
// kernel: _forward_impl.1
$region0: #{_forward_impl.1}
  #allocation0 [shape = 'u32[]', space=smem, size = 0x4, offset = 0x4, fixed_abs, tag = 'smem constant byte address 0x4 - core index']
  #allocation1 [shape = 'u32[144,128]{1,0:T(1,128)}', space=vmem, size = 0x12000, scoped, tag = 'internal scratch']
  #allocation2 [shape = 'f32[1]{0:T(128)S(6)}', space=smem, size = 0x200, scoped, tag = 'scoped memory for _forward_impl.1']
  %s0 = inlined_call_operand.vmem [shape: bf16[128,64], index: 0, kind: input, shape index: {}]
  %s1 = inlined_call_operand.vmem [shape: bf16[64,32], index: 1, kind: input, shape index: {}]
  %s2 = inlined_call_operand.vmem [shape: f32[1,32], index: 2, kind: input, shape index: {}]
  %s3 = inlined_call_operand.vmem [shape: bf16[256,64], index: 3, kind: input, shape index: {}]
  %s4 = inlined_call_operand.vmem [shape: bf16[512,128], index: 4, kind: input, shape index: {}]
  %s5 = inlined_call_operand.vmem [shape: f32[1,128], index: 5, kind: input, shape index: {}]
  %s6 = inlined_call_operand.vmem [shape: f32[16,128], index: 6, kind: input, shape index: {}]
  %s7 = inlined_call_operand.<no memory space> [shape: f32[1], index: 7, kind: input, shape index: {}]
  %s8 = inlined_call_operand.vmem [shape: f32[2,1,128], index: 8, kind: output, shape index: {}]
  %s9 = sld [smem:[#allocation0]]
  $region65: #{_forward_impl.1} parent=0
    _
  %s11 = ssub.s32 1, %s9
  %s12 = scalar_select 0, %s11, %s9
  %13 = sst [smem:[#allocation2]] %s7
  loop: start=0, step=1, limit=4
  $region2: #{_forward_impl.1} parent=0 // loop_pre_header
    _
  $region3: #{_forward_impl.1} parent=0 // loop_header
    %s15 = sphi 0, %s19
    %p16 = scmp.ge.s32.totalorder %s15, 4
    %s25 = sphi 0, %s27
    %s28 = sphi 0, %s25
    %s29 = sphi 0, %s28
    %s45 = sphi 0, %s29
    %s49 = sphi 0, %s49
    %s51 = sphi 0, %s49
    %s52 = sphi 0, %s51
    %s66 = sphi 0, %s52
    %s70 = sphi 0, %s70
    %s72 = sphi 0, %s70
    %s73 = sphi 0, %s72
    %s87 = sphi 0, %s73
    %s91 = sphi 0, %s91
    %s93 = sphi 0, %s91
    %s94 = sphi 0, %s93
    %s108 = sphi 0, %s94
    %s112 = sphi 0, %s112
    %s114 = sphi 0, %s112
    %s115 = sphi 0, %s114
    %s129 = sphi 0, %s115
    %s133 = sphi 0, %s133
    %s135 = sphi 0, %s133
    %s136 = sphi 0, %s135
    %s150 = sphi 0, %s136
    %s154 = sphi 0, %s154
    %s156 = sphi 0, %s154
    %s157 = sphi 0, %s156
    %s171 = sphi 0, %s157
    %s175 = sphi 0, %s175
    %s177 = sphi 0, %s175
    %s178 = sphi 0, %s177
    %s192 = sphi 0, %s178
    %s198 = sphi 0, %s200
    %s201 = sphi 0, %s198
    %s202 = sphi 0, %s201
    %s218 = sphi 0, %s202
  $region4: #{_forward_impl.1} parent=0 // loop_header_branch
    %18 = sbr.rel (%p16) target = $region8
  $region5: #{_forward_impl.1} parent=0 // loop_body
    %s20 = ssub.s32 %s15, 1
    %s21 = ssub.s32 %s15, 2
    %s22 = sadd.s32 %s15, 1
    %s23 = ssub.s32 %s15, %s22
    %p24 = scmp.eq.s32.totalorder %s23, 0
    %s26 = sadd.s32 %s25, 1
    %s27 = scalar_select %p24, %s25, %s26
    %p30 = pneg %p24
    %p31 = scmp.eq.s32.totalorder %s15, 1
    %p32 = por %p30, %p31
    %p33 = scmp.ne.s32.totalorder %s25, %s28
    %p34 = scmp.eq.s32.totalorder %s15, 0
    %p35 = por %p33, %p34
    %p36 = scmp.ne.s32.totalorder %s25, %s28
    %p37 = scmp.eq.s32.totalorder %s20, 1
    %p38 = por %p36, %p37
    %p39 = scmp.ne.s32.totalorder %s28, %s29
    %p40 = scmp.eq.s32.totalorder %s20, 0
    %p41 = por %p39, %p40
    %p42 = scmp.ne.s32.totalorder %s28, %s29
    %p43 = scmp.eq.s32.totalorder %s21, 1
    %p44 = por %p42, %p43
    %p46 = scmp.ne.s32.totalorder %s29, %s45
    %p47 = scmp.eq.s32.totalorder %s21, 0
    %p48 = por %p46, %p47
    %s50 = sadd.s32 %s49, 1
    %p53 = scmp.eq.s32.totalorder %s15, 1
    %p54 = scmp.ne.s32.totalorder %s49, %s51
    %p55 = scmp.eq.s32.totalorder %s15, 0
    %p56 = por %p54, %p55
    %p57 = scmp.ne.s32.totalorder %s49, %s51
    %p58 = scmp.eq.s32.totalorder %s20, 1
    %p59 = por %p57, %p58
    %p60 = scmp.ne.s32.totalorder %s51, %s52
    %p61 = scmp.eq.s32.totalorder %s20, 0
    %p62 = por %p60, %p61
    %p63 = scmp.ne.s32.totalorder %s51, %s52
    %p64 = scmp.eq.s32.totalorder %s21, 1
    %p65 = por %p63, %p64
    %p67 = scmp.ne.s32.totalorder %s52, %s66
    %p68 = scmp.eq.s32.totalorder %s21, 0
    %p69 = por %p67, %p68
    %s71 = sadd.s32 %s70, 1
    %p74 = scmp.eq.s32.totalorder %s15, 1
    %p75 = scmp.ne.s32.totalorder %s70, %s72
    %p76 = scmp.eq.s32.totalorder %s15, 0
    %p77 = por %p75, %p76
    %p78 = scmp.ne.s32.totalorder %s70, %s72
    %p79 = scmp.eq.s32.totalorder %s20, 1
    %p80 = por %p78, %p79
    %p81 = scmp.ne.s32.totalorder %s72, %s73
    %p82 = scmp.eq.s32.totalorder %s20, 0
    %p83 = por %p81, %p82
    %p84 = scmp.ne.s32.totalorder %s72, %s73
    %p85 = scmp.eq.s32.totalorder %s21, 1
    %p86 = por %p84, %p85
    %p88 = scmp.ne.s32.totalorder %s73, %s87
    %p89 = scmp.eq.s32.totalorder %s21, 0
    %p90 = por %p88, %p89
    %s92 = sadd.s32 %s91, 1
    %p95 = scmp.eq.s32.totalorder %s15, 1
    %p96 = scmp.ne.s32.totalorder %s91, %s93
    %p97 = scmp.eq.s32.totalorder %s15, 0
    %p98 = por %p96, %p97
    %p99 = scmp.ne.s32.totalorder %s91, %s93
    %p100 = scmp.eq.s32.totalorder %s20, 1
    %p101 = por %p99, %p100
    %p102 = scmp.ne.s32.totalorder %s93, %s94
    %p103 = scmp.eq.s32.totalorder %s20, 0
    %p104 = por %p102, %p103
    %p105 = scmp.ne.s32.totalorder %s93, %s94
    %p106 = scmp.eq.s32.totalorder %s21, 1
    %p107 = por %p105, %p106
    %p109 = scmp.ne.s32.totalorder %s94, %s108
    %p110 = scmp.eq.s32.totalorder %s21, 0
    %p111 = por %p109, %p110
    %s113 = sadd.s32 %s112, 1
    %p116 = scmp.eq.s32.totalorder %s15, 1
    %p117 = scmp.ne.s32.totalorder %s112, %s114
    %p118 = scmp.eq.s32.totalorder %s15, 0
    %p119 = por %p117, %p118
    %p120 = scmp.ne.s32.totalorder %s112, %s114
    %p121 = scmp.eq.s32.totalorder %s20, 1
    %p122 = por %p120, %p121
    %p123 = scmp.ne.s32.totalorder %s114, %s115
    %p124 = scmp.eq.s32.totalorder %s20, 0
    %p125 = por %p123, %p124
    %p126 = scmp.ne.s32.totalorder %s114, %s115
    %p127 = scmp.eq.s32.totalorder %s21, 1
    %p128 = por %p126, %p127
    %p130 = scmp.ne.s32.totalorder %s115, %s129
    %p131 = scmp.eq.s32.totalorder %s21, 0
    %p132 = por %p130, %p131
    %s134 = sadd.s32 %s133, 1
    %p137 = scmp.eq.s32.totalorder %s15, 1
    %p138 = scmp.ne.s32.totalorder %s133, %s135
    %p139 = scmp.eq.s32.totalorder %s15, 0
    %p140 = por %p138, %p139
    %p141 = scmp.ne.s32.totalorder %s133, %s135
    %p142 = scmp.eq.s32.totalorder %s20, 1
    %p143 = por %p141, %p142
    %p144 = scmp.ne.s32.totalorder %s135, %s136
    %p145 = scmp.eq.s32.totalorder %s20, 0
    %p146 = por %p144, %p145
    %p147 = scmp.ne.s32.totalorder %s135, %s136
    %p148 = scmp.eq.s32.totalorder %s21, 1
    %p149 = por %p147, %p148
    %p151 = scmp.ne.s32.totalorder %s136, %s150
    %p152 = scmp.eq.s32.totalorder %s21, 0
    %p153 = por %p151, %p152
    %s155 = sadd.s32 %s154, 1
    %p158 = scmp.eq.s32.totalorder %s15, 1
    %p159 = scmp.ne.s32.totalorder %s154, %s156
    %p160 = scmp.eq.s32.totalorder %s15, 0
    %p161 = por %p159, %p160
    %p162 = scmp.ne.s32.totalorder %s154, %s156
    %p163 = scmp.eq.s32.totalorder %s20, 1
    %p164 = por %p162, %p163
    %p165 = scmp.ne.s32.totalorder %s156, %s157
    %p166 = scmp.eq.s32.totalorder %s20, 0
    %p167 = por %p165, %p166
    %p168 = scmp.ne.s32.totalorder %s156, %s157
    %p169 = scmp.eq.s32.totalorder %s21, 1
    %p170 = por %p168, %p169
    %p172 = scmp.ne.s32.totalorder %s157, %s171
    %p173 = scmp.eq.s32.totalorder %s21, 0
    %p174 = por %p172, %p173
    %s176 = sadd.s32 %s175, 1
    %p179 = scmp.eq.s32.totalorder %s15, 1
    %p180 = scmp.ne.s32.totalorder %s175, %s177
    %p181 = scmp.eq.s32.totalorder %s15, 0
    %p182 = por %p180, %p181
    %p183 = scmp.ne.s32.totalorder %s175, %s177
    %p184 = scmp.eq.s32.totalorder %s20, 1
    %p185 = por %p183, %p184
    %p186 = scmp.ne.s32.totalorder %s177, %s178
    %p187 = scmp.eq.s32.totalorder %s20, 0
    %p188 = por %p186, %p187
    %p189 = scmp.ne.s32.totalorder %s177, %s178
    %p190 = scmp.eq.s32.totalorder %s21, 1
    %p191 = por %p189, %p190
    %p193 = scmp.ne.s32.totalorder %s178, %s192
    %p194 = scmp.eq.s32.totalorder %s21, 0
    %p195 = por %p193, %p194
    %s196 = ssub.s32 %s15, %s22
    %p197 = scmp.eq.s32.totalorder %s196, 0
    %s199 = sadd.s32 %s198, 1
    %s200 = scalar_select %p197, %s198, %s199
    %p203 = pneg %p197
    %p204 = scmp.eq.s32.totalorder %s15, 1
    %p205 = por %p203, %p204
    %p206 = scmp.ne.s32.totalorder %s198, %s201
    %p207 = scmp.eq.s32.totalorder %s15, 0
    %p208 = por %p206, %p207
    %p209 = scmp.ne.s32.totalorder %s198, %s201
    %p210 = scmp.eq.s32.totalorder %s20, 1
    %p211 = por %p209, %p210
    %p212 = scmp.ne.s32.totalorder %s201, %s202
    %p213 = scmp.eq.s32.totalorder %s20, 0
    %p214 = por %p212, %p213
    %p215 = scmp.ne.s32.totalorder %s201, %s202
    %p216 = scmp.eq.s32.totalorder %s21, 1
    %p217 = por %p215, %p216
    %p219 = scmp.ne.s32.totalorder %s202, %s218
    %p220 = scmp.eq.s32.totalorder %s21, 0
    %p221 = por %p219, %p220
    %p222 = scmp.le.s32.totalorder 1, %s15
    %p223 = scmp.lt.s32.totalorder %s15, 3
    %p224 = pnand %p222, %p223
    %p225 = pneg %p224
    // Predicated region
    $region9: #{_forward_impl.1} parent=5 // pred_check
      _
    $region10: #{_forward_impl.1} parent=5 // pred_check_branch
      %227 = sbr.rel (%p224) target = $region12
    $region11: #{_forward_impl.1} parent=5 // pred_region
      %s228 = ssub.s32 %s15, 1
      // Predicated region
      $region13: #{_forward_impl.1} parent=11 // pred_check
        %p229 = pneg %p62
      $region14: #{_forward_impl.1} parent=11 // pred_check_branch
        %231 = sbr.rel (%p229) target = $region16
      $region15: #{_forward_impl.1} parent=11 // pred_region
        _
      $region16: #{_forward_impl.1} parent=11 // pred_fallthru
        _
      // Predicated region
      $region17: #{_forward_impl.1} parent=11 // pred_check
        %p232 = pneg %p83
      $region18: #{_forward_impl.1} parent=11 // pred_check_branch
        %234 = sbr.rel (%p232) target = $region20
      $region19: #{_forward_impl.1} parent=11 // pred_region
        _
      $region20: #{_forward_impl.1} parent=11 // pred_fallthru
        _
      // Predicated region
      $region21: #{_forward_impl.1} parent=11 // pred_check
        %p235 = pneg %p104
      $region22: #{_forward_impl.1} parent=11 // pred_check_branch
        %237 = sbr.rel (%p235) target = $region24
      $region23: #{_forward_impl.1} parent=11 // pred_region
        _
      $region24: #{_forward_impl.1} parent=11 // pred_fallthru
        _
      // Predicated region
      $region25: #{_forward_impl.1} parent=11 // pred_check
        %p238 = pneg %p125
      $region26: #{_forward_impl.1} parent=11 // pred_check_branch
        %240 = sbr.rel (%p238) target = $region28
      $region27: #{_forward_impl.1} parent=11 // pred_region
        _
      $region28: #{_forward_impl.1} parent=11 // pred_fallthru
        _
      // Predicated region
      $region29: #{_forward_impl.1} parent=11 // pred_check
        %p241 = pneg %p146
      $region30: #{_forward_impl.1} parent=11 // pred_check_branch
        %243 = sbr.rel (%p241) target = $region32
      $region31: #{_forward_impl.1} parent=11 // pred_region
        _
      $region32: #{_forward_impl.1} parent=11 // pred_fallthru
        _
      // Predicated region
      $region33: #{_forward_impl.1} parent=11 // pred_check
        %p244 = pneg %p167
      $region34: #{_forward_impl.1} parent=11 // pred_check_branch
        %246 = sbr.rel (%p244) target = $region36
      $region35: #{_forward_impl.1} parent=11 // pred_region
        _
      $region36: #{_forward_impl.1} parent=11 // pred_fallthru
        _
      // Predicated region
      $region37: #{_forward_impl.1} parent=11 // pred_check
        %p247 = pneg %p188
      $region38: #{_forward_impl.1} parent=11 // pred_check_branch
        %249 = sbr.rel (%p247) target = $region40
      $region39: #{_forward_impl.1} parent=11 // pred_region
        _
      $region40: #{_forward_impl.1} parent=11 // pred_fallthru
        _
    $region12: #{_forward_impl.1} parent=5 // pred_fallthru
      _
    %p250 = scmp.lt.s32.totalorder %s15, 2
    // Predicated region
    $region41: #{_forward_impl.1} parent=5 // pred_check
      %p251 = pneg %p250
    $region42: #{_forward_impl.1} parent=5 // pred_check_branch
      %253 = sbr.rel (%p251) target = $region44
    $region43: #{_forward_impl.1} parent=5 // pred_region
      // Predicated region
      $region45: #{_forward_impl.1} parent=43 // pred_check
        %p254 = pneg %p35
      $region46: #{_forward_impl.1} parent=43 // pred_check_branch
        %256 = sbr.rel (%p254) target = $region48
      $region47: #{_forward_impl.1} parent=43 // pred_region
        %s257 = smul.u32 8, %s15
        %p258 = scmp.lt.s32.totalorder %s257, 15
        %s259 = scalar_select %p258, %s257, 15
        %s260 = smul.addr %s259, 4
        %s261 = scalar_lea.vmem %s0, %s260
        %s262 = smul.u32 8, %s15
      $region48: #{_forward_impl.1} parent=43 // pred_fallthru
        _
    $region44: #{_forward_impl.1} parent=5 // pred_fallthru
      _
    %p263 = scmp.le.s32.totalorder 1, %s15
    %p264 = scmp.lt.s32.totalorder %s15, 3
    %p265 = pnand %p263, %p264
    %p266 = pneg %p265
    // Predicated region
    $region49: #{_forward_impl.1} parent=5 // pred_check
      _
    $region50: #{_forward_impl.1} parent=5 // pred_check_branch
      %268 = sbr.rel (%p265) target = $region52
    $region51: #{_forward_impl.1} parent=5 // pred_region
      %s269 = ssub.s32 %s15, 1
      %s270 = smul.u32 8, %s20
      %p271 = scmp.lt.s32.totalorder %s270, 15
      %s272 = scalar_select %p271, %s270, 15
      %s273 = smul.addr %s272, 4
      %s274 = scalar_lea.vmem %s0, %s273
      %p275 = pneg %p41
      %p276 = pneg %p38
      %p277 = pneg %p62
      %p278 = pneg %p59
      %p279 = pneg %p83
      %p280 = pneg %p80
      %p281 = pneg %p104
      %p282 = pneg %p101
      %p283 = pneg %p125
      %p284 = pneg %p122
      %p285 = pneg %p146
      %p286 = pneg %p143
      %p287 = pneg %p167
      %p288 = pneg %p164
      %p289 = pneg %p188
      %p290 = pneg %p185
      %p291 = pneg %p214
      %p292 = pneg %p211
      %p293 = scmp.lt.s32.totalorder %s20, 1
      %s294 = scalar_select %p293, %s20, 1
      %s295 = scalar_lea.vmem %s8, %s294
      %s296 = smul.u32 8, %s20
      %p297 = scmp.lt.s32.totalorder %s296, 15
      %s298 = scalar_select %p297, %s296, 15
      %s299 = smul.addr %s298, 4
      %s300 = scalar_lea.vmem %s0, %s299
      %s301 = smul.u32 8, %s20
      %p302 = scmp.lt.s32.totalorder %s20, 1
      %s303 = scalar_select %p302, %s20, 1
      %s304 = scalar_lea.vmem %s8, %s303
      %v306 = vld [vmem:[%s300] sm:$0xf]
      %v307 = vld [vmem:[%s300 + $0x4] sm:$0xf]
      %v308 = vld [vmem:[%s300 + $0x8] sm:$0xf]
      %v309 = vld [vmem:[%s300 + $0xc] sm:$0xf]
      %v310 = vld [vmem:[%s300 + $0x10] sm:$0xf]
      %v311 = vld [vmem:[%s300 + $0x14] sm:$0xf]
      %v312 = vld [vmem:[%s300 + $0x18] sm:$0xf]
      %v313 = vld [vmem:[%s300 + $0x1c] sm:$0xf]
      %v314 = vld [vmem:[%s1] sm:$0xf]
      %v315 = vld [vmem:[%s1 + $0x4] sm:$0xf]
      %v316 = vld [vmem:[%s1 + $0x8] sm:$0xf]
      %v317 = vld [vmem:[%s1 + $0xc] sm:$0xf]
      %v318 = vld [vmem:[%s1 + $0x10] sm:$0xf]
      %v319 = vld [vmem:[%s1 + $0x14] sm:$0xf]
      %v320 = vld [vmem:[%s1 + $0x18] sm:$0xf]
      %v321 = vld [vmem:[%s1 + $0x1c] sm:$0xf]
      %v322 = vld [vmem:[%s2] sm:$0x1]
      %v324 = vlaneseq
      %v325 = vshrl.u32 %v324, 7
      %v326 = vsub.s32 0, %v325
      %v327 = vrot.slane %v322, %v326
      %v337 = vunpack.c.l.b16 %v306
      %v338 = vunpack.c.l.b16 %v307
      %v339 = vunpack.c.l.b16 %v308
      %v340 = vunpack.c.l.b16 %v309
      %v341 = vunpack.c.l.b16 %v310
      %v342 = vunpack.c.l.b16 %v311
      %v343 = vunpack.c.l.b16 %v312
      %v344 = vunpack.c.l.b16 %v313
      %v345 = vpack.c.b16 %v338, %v337
      %v346 = vpack.c.b16 %v340, %v339
      %v347 = vpack.c.b16 %v342, %v341
      %v348 = vpack.c.b16 %v344, %v343
      %v357 = vunpack.c.l.b16 %v314
      %v358 = vunpack.c.l.b16 %v315
      %v359 = vunpack.c.l.b16 %v316
      %v360 = vunpack.c.l.b16 %v317
      %v361 = vunpack.c.l.b16 %v318
      %v362 = vunpack.c.l.b16 %v319
      %v363 = vunpack.c.l.b16 %v320
      %v364 = vunpack.c.l.b16 %v321
      %v365 = vpack.c.b16 %v358, %v357
      %v366 = vpack.c.b16 %v360, %v359
      %v367 = vpack.c.b16 %v362, %v361
      %v368 = vpack.c.b16 %v364, %v363
      %vm373 = vcmask 523264
      %v375 = vsel %vm373, %v345, 0
      %v378 = vsel %vm373, %v346, 0
      %v381 = vsel %vm373, %v347, 0
      %v384 = vsel %vm373, %v348, 0
      %386 = vmatprep.subr.bf16.mxu0 0
      %387 = vmatpush1.bf16.msra.mxu0 0
      %388 = vmatprep.subr.bf16.mxu0 0
      %389 = vmatpush1.bf16.msra.mxu0 0
      %390 = vmatprep.subr.bf16.mxu0 0
      %391 = vmatpush1.bf16.msra.mxu0 0
      %392 = vmatprep.subr.bf16.mxu0 0
      %393 = vmatpush1.bf16.msra.mxu0 0
      %394 = vmatprep.subr.bf16.mxu0 0
      %395 = vmatpush1.bf16.msra.mxu0 %v368
      %396 = vmatprep.subr.bf16.mxu0 0
      %397 = vmatpush1.bf16.msra.mxu0 %v367
      %398 = vmatprep.subr.bf16.mxu0 0
      %399 = vmatpush1.bf16.msra.mxu0 %v366
      %400 = vmatprep.subr.bf16.mxu0 0
      %401 = vmatpush1.bf16.msra.mxu0 %v365
      %402 = vmatprep.subr.bf16.mxu0 0
      %403 = vmatpush2.bf16.msra.mxu0 0
      %404 = vmatprep.subr.bf16.mxu0 0
      %405 = vmatpush2.bf16.msra.mxu0 0
      %406 = vmatprep.subr.bf16.mxu0 0
      %407 = vmatpush2.bf16.msra.mxu0 0
      %408 = vmatprep.subr.bf16.mxu0 0
      %409 = vmatpush2.bf16.msra.mxu0 0
      %410 = vmatprep.subr.bf16.mxu0 0
      %411 = vmatpush2.bf16.msra.mxu0 0
      %412 = vmatprep.subr.bf16.mxu0 0
      %413 = vmatpush2.bf16.msra.mxu0 0
      %414 = vmatprep.subr.bf16.mxu0 0
      %415 = vmatpush2.bf16.msra.mxu0 0
      %416 = vmatprep.subr.bf16.mxu0 0
      %417 = vmatpush2.bf16.msra.mxu0 0
      %418 = vmatprep.mubr.bf16.mxu0 0
      %419 = vmatmul.mubr.bf16.gmra.mxu0 %v375
      %v420 = vpop.f32.mrf.mxu0
      %v421 = vadd.f32 %v327, %v420
      %v422 = vpop.f32.mrf.mxu0
      %v423 = vpop.f32.mrf.mxu0
      %v424 = vadd.f32 %v327, %v423
      %v425 = vpop.f32.mrf.mxu0
      %426 = vmatprep.mubr.bf16.mxu0 0
      %427 = vmatmul.mubr.bf16.gmra.mxu0 %v378
      %v428 = vpop.f32.mrf.mxu0
      %v429 = vadd.f32 %v327, %v428
      %v430 = vpop.f32.mrf.mxu0
      %v431 = vpop.f32.mrf.mxu0
      %v432 = vadd.f32 %v327, %v431
      %v433 = vpop.f32.mrf.mxu0
      %434 = vmatprep.mubr.bf16.mxu0 0
      %435 = vmatmul.mubr.bf16.gmra.mxu0 %v381
      %v436 = vpop.f32.mrf.mxu0
      %v437 = vadd.f32 %v327, %v436
      %v438 = vpop.f32.mrf.mxu0
      %v439 = vpop.f32.mrf.mxu0
      %v440 = vadd.f32 %v327, %v439
      %v441 = vpop.f32.mrf.mxu0
      %442 = vmatprep.mubr.bf16.mxu0 0
      %443 = vmatmul.mubr.bf16.gmra.mxu0 %v384
      %v444 = vpop.f32.mrf.mxu0
      %v445 = vadd.f32 %v327, %v444
      %v446 = vpop.f32.mrf.mxu0
      %v447 = vpop.f32.mrf.mxu0
      %v448 = vadd.f32 %v327, %v447
      %v449 = vpop.f32.mrf.mxu0
      %450 = vdwg.mxu0
      %vm451 = vcmp.gt.f32.partialorder %v421, 0.0
      %vm452 = vcmp.gt.f32.partialorder %v424, 0.0
      %vm453 = vcmp.gt.f32.partialorder %v429, 0.0
      %vm454 = vcmp.gt.f32.partialorder %v432, 0.0
      %vm455 = vcmp.gt.f32.partialorder %v437, 0.0
      %vm456 = vcmp.gt.f32.partialorder %v440, 0.0
      %vm457 = vcmp.gt.f32.partialorder %v445, 0.0
      %vm458 = vcmp.gt.f32.partialorder %v448, 0.0
      %v459 = vmul.f32 %v421, 0.2
      %v460 = vmul.f32 %v424, 0.2
      %v461 = vmul.f32 %v429, 0.2
      %v462 = vmul.f32 %v432, 0.2
      %v463 = vmul.f32 %v437, 0.2
      %v464 = vmul.f32 %v440, 0.2
      %v465 = vmul.f32 %v445, 0.2
      %v466 = vmul.f32 %v448, 0.2
      %v467 = vsel %vm451, %v421, %v459
      %v468 = vsel %vm452, %v424, %v460
      %v469 = vsel %vm453, %v429, %v461
      %v470 = vsel %vm454, %v432, %v462
      %v471 = vsel %vm455, %v437, %v463
      %v472 = vsel %vm456, %v440, %v464
      %v473 = vsel %vm457, %v445, %v465
      %v474 = vsel %vm458, %v448, %v466
      %v475 = vpack.c.bf16 %v468, %v467
      %v476 = vpack.c.bf16 %v470, %v469
      %v477 = vpack.c.bf16 %v472, %v471
      %v478 = vpack.c.bf16 %v474, %v473
      %v479 = vld [vmem:[%s3] sm:$0xf]
      %v480 = vld [vmem:[%s3 + $0x4] sm:$0xf]
      %v481 = vld [vmem:[%s3 + $0x8] sm:$0xf]
      %v482 = vld [vmem:[%s3 + $0xc] sm:$0xf]
      %v483 = vld [vmem:[%s3 + $0x10] sm:$0xf]
      %v484 = vld [vmem:[%s3 + $0x14] sm:$0xf]
      %v485 = vld [vmem:[%s3 + $0x18] sm:$0xf]
      %v486 = vld [vmem:[%s3 + $0x1c] sm:$0xf]
      %v487 = vld [vmem:[%s3 + $0x20] sm:$0xf]
      %v488 = vld [vmem:[%s3 + $0x24] sm:$0xf]
      %v489 = vld [vmem:[%s3 + $0x28] sm:$0xf]
      %v490 = vld [vmem:[%s3 + $0x2c] sm:$0xf]
      %v491 = vld [vmem:[%s3 + $0x30] sm:$0xf]
      %v492 = vld [vmem:[%s3 + $0x34] sm:$0xf]
      %v493 = vld [vmem:[%s3 + $0x38] sm:$0xf]
      %v494 = vld [vmem:[%s3 + $0x3c] sm:$0xf]
      %v495 = vld [vmem:[%s3 + $0x40] sm:$0xf]
      %v496 = vld [vmem:[%s3 + $0x44] sm:$0xf]
      %v497 = vld [vmem:[%s3 + $0x48] sm:$0xf]
      %v498 = vld [vmem:[%s3 + $0x4c] sm:$0xf]
      %v499 = vld [vmem:[%s3 + $0x50] sm:$0xf]
      %v500 = vld [vmem:[%s3 + $0x54] sm:$0xf]
      %v501 = vld [vmem:[%s3 + $0x58] sm:$0xf]
      %v502 = vld [vmem:[%s3 + $0x5c] sm:$0xf]
      %v503 = vld [vmem:[%s3 + $0x60] sm:$0xf]
      %v504 = vld [vmem:[%s3 + $0x64] sm:$0xf]
      %v505 = vld [vmem:[%s3 + $0x68] sm:$0xf]
      %v506 = vld [vmem:[%s3 + $0x6c] sm:$0xf]
      %v507 = vld [vmem:[%s3 + $0x70] sm:$0xf]
      %v508 = vld [vmem:[%s3 + $0x74] sm:$0xf]
      %v509 = vld [vmem:[%s3 + $0x78] sm:$0xf]
      %v510 = vld [vmem:[%s3 + $0x7c] sm:$0xf]
      %v543 = vunpack.c.l.b16 %v479
      %v544 = vunpack.c.l.b16 %v480
      %v545 = vunpack.c.l.b16 %v481
      %v546 = vunpack.c.l.b16 %v482
      %v547 = vunpack.c.l.b16 %v483
      %v548 = vunpack.c.l.b16 %v484
      %v549 = vunpack.c.l.b16 %v485
      %v550 = vunpack.c.l.b16 %v486
      %v551 = vunpack.c.l.b16 %v487
      %v552 = vunpack.c.l.b16 %v488
      %v553 = vunpack.c.l.b16 %v489
      %v554 = vunpack.c.l.b16 %v490
      %v555 = vunpack.c.l.b16 %v491
      %v556 = vunpack.c.l.b16 %v492
      %v557 = vunpack.c.l.b16 %v493
      %v558 = vunpack.c.l.b16 %v494
      %v559 = vunpack.c.l.b16 %v495
      %v560 = vunpack.c.l.b16 %v496
      %v561 = vunpack.c.l.b16 %v497
      %v562 = vunpack.c.l.b16 %v498
      %v563 = vunpack.c.l.b16 %v499
      %v564 = vunpack.c.l.b16 %v500
      %v565 = vunpack.c.l.b16 %v501
      %v566 = vunpack.c.l.b16 %v502
      %v567 = vunpack.c.l.b16 %v503
      %v568 = vunpack.c.l.b16 %v504
      %v569 = vunpack.c.l.b16 %v505
      %v570 = vunpack.c.l.b16 %v506
      %v571 = vunpack.c.l.b16 %v507
      %v572 = vunpack.c.l.b16 %v508
      %v573 = vunpack.c.l.b16 %v509
      %v574 = vunpack.c.l.b16 %v510
      %v575 = vpack.c.b16 %v544, %v543
      %v576 = vpack.c.b16 %v546, %v545
      %v577 = vpack.c.b16 %v548, %v547
      %v578 = vpack.c.b16 %v550, %v549
      %v579 = vpack.c.b16 %v552, %v551
      %v580 = vpack.c.b16 %v554, %v553
      %v581 = vpack.c.b16 %v556, %v555
      %v582 = vpack.c.b16 %v558, %v557
      %v583 = vpack.c.b16 %v560, %v559
      %v584 = vpack.c.b16 %v562, %v561
      %v585 = vpack.c.b16 %v564, %v563
      %v586 = vpack.c.b16 %v566, %v565
      %v587 = vpack.c.b16 %v568, %v567
      %v588 = vpack.c.b16 %v570, %v569
      %v589 = vpack.c.b16 %v572, %v571
      %v590 = vpack.c.b16 %v574, %v573
      %v592 = vsel %vm373, %v575, 0
      %v595 = vsel %vm373, %v576, 0
      %v598 = vsel %vm373, %v577, 0
      %v601 = vsel %vm373, %v578, 0
      %v604 = vsel %vm373, %v579, 0
      %v607 = vsel %vm373, %v580, 0
      %v610 = vsel %vm373, %v581, 0
      %v613 = vsel %vm373, %v582, 0
      %v616 = vsel %vm373, %v583, 0
      %v619 = vsel %vm373, %v584, 0
      %v622 = vsel %vm373, %v585, 0
      %v625 = vsel %vm373, %v586, 0
      %v628 = vsel %vm373, %v587, 0
      %v631 = vsel %vm373, %v588, 0
      %v634 = vsel %vm373, %v589, 0
      %v637 = vsel %vm373, %v590, 0
      %639 = vmatprep.subr.bf16.mxu0 0
      %640 = vmatpush1.bf16.msra.mxu0 0
      %641 = vmatprep.subr.bf16.mxu0 0
      %642 = vmatpush1.bf16.msra.mxu0 0
      %643 = vmatprep.subr.bf16.mxu0 0
      %644 = vmatpush1.bf16.msra.mxu0 0
      %645 = vmatprep.subr.bf16.mxu0 0
      %646 = vmatpush1.bf16.msra.mxu0 0
      %647 = vmatprep.subr.bf16.mxu0 0
      %648 = vmatpush1.bf16.msra.mxu0 %v478
      %649 = vmatprep.subr.bf16.mxu0 0
      %650 = vmatpush1.bf16.msra.mxu0 %v477
      %651 = vmatprep.subr.bf16.mxu0 0
      %652 = vmatpush1.bf16.msra.mxu0 %v476
      %653 = vmatprep.subr.bf16.mxu0 0
      %654 = vmatpush1.bf16.msra.mxu0 %v475
      %655 = vmatprep.subr.bf16.mxu0 0
      %656 = vmatpush2.bf16.msra.mxu0 0
      %657 = vmatprep.subr.bf16.mxu0 0
      %658 = vmatpush2.bf16.msra.mxu0 0
      %659 = vmatprep.subr.bf16.mxu0 0
      %660 = vmatpush2.bf16.msra.mxu0 0
      %661 = vmatprep.subr.bf16.mxu0 0
      %662 = vmatpush2.bf16.msra.mxu0 0
      %663 = vmatprep.subr.bf16.mxu0 0
      %664 = vmatpush2.bf16.msra.mxu0 0
      %665 = vmatprep.subr.bf16.mxu0 0
      %666 = vmatpush2.bf16.msra.mxu0 0
      %667 = vmatprep.subr.bf16.mxu0 0
      %668 = vmatpush2.bf16.msra.mxu0 0
      %669 = vmatprep.subr.bf16.mxu0 0
      %670 = vmatpush2.bf16.msra.mxu0 0
      %671 = vmatprep.mubr.bf16.mxu0 0
      %672 = vmatmul.mubr.bf16.gmra.mxu0 %v592
      %v673 = vpop.f32.mrf.mxu0
      %v674 = vadd.f32 0.0, %v673
      %v675 = vpop.f32.mrf.mxu0
      %v676 = vpop.f32.mrf.mxu0
      %v677 = vadd.f32 0.0, %v676
      %v678 = vpop.f32.mrf.mxu0
      %679 = vmatprep.mubr.bf16.mxu0 0
      %680 = vmatmul.mubr.bf16.gmra.mxu0 %v595
      %v681 = vpop.f32.mrf.mxu0
      %v682 = vadd.f32 0.0, %v681
      %v683 = vpop.f32.mrf.mxu0
      %v684 = vpop.f32.mrf.mxu0
      %v685 = vadd.f32 0.0, %v684
      %v686 = vpop.f32.mrf.mxu0
      %687 = vmatprep.mubr.bf16.mxu0 0
      %688 = vmatmul.mubr.bf16.gmra.mxu0 %v598
      %v689 = vpop.f32.mrf.mxu0
      %v690 = vadd.f32 0.0, %v689
      %v691 = vpop.f32.mrf.mxu0
      %v692 = vpop.f32.mrf.mxu0
      %v693 = vadd.f32 0.0, %v692
      %v694 = vpop.f32.mrf.mxu0
      %695 = vmatprep.mubr.bf16.mxu0 0
      %696 = vmatmul.mubr.bf16.gmra.mxu0 %v601
      %v697 = vpop.f32.mrf.mxu0
      %v698 = vadd.f32 0.0, %v697
      %v699 = vpop.f32.mrf.mxu0
      %v700 = vpop.f32.mrf.mxu0
      %v701 = vadd.f32 0.0, %v700
      %v702 = vpop.f32.mrf.mxu0
      %703 = vmatprep.mubr.bf16.mxu0 0
      %704 = vmatmul.mubr.bf16.gmra.mxu0 %v604
      %v705 = vpop.f32.mrf.mxu0
      %v706 = vadd.f32 0.0, %v705
      %v707 = vpop.f32.mrf.mxu0
      %v708 = vpop.f32.mrf.mxu0
      %v709 = vadd.f32 0.0, %v708
      %v710 = vpop.f32.mrf.mxu0
      %711 = vmatprep.mubr.bf16.mxu0 0
      %712 = vmatmul.mubr.bf16.gmra.mxu0 %v607
      %v713 = vpop.f32.mrf.mxu0
      %v714 = vadd.f32 0.0, %v713
      %v715 = vpop.f32.mrf.mxu0
      %v716 = vpop.f32.mrf.mxu0
      %v717 = vadd.f32 0.0, %v716
      %v718 = vpop.f32.mrf.mxu0
      %719 = vmatprep.mubr.bf16.mxu0 0
      %720 = vmatmul.mubr.bf16.gmra.mxu0 %v610
      %v721 = vpop.f32.mrf.mxu0
      %v722 = vadd.f32 0.0, %v721
      %v723 = vpop.f32.mrf.mxu0
      %v724 = vpop.f32.mrf.mxu0
      %v725 = vadd.f32 0.0, %v724
      %v726 = vpop.f32.mrf.mxu0
      %727 = vmatprep.mubr.bf16.mxu0 0
      %728 = vmatmul.mubr.bf16.gmra.mxu0 %v613
      %v729 = vpop.f32.mrf.mxu0
      %v730 = vadd.f32 0.0, %v729
      %v731 = vpop.f32.mrf.mxu0
      %v732 = vpop.f32.mrf.mxu0
      %v733 = vadd.f32 0.0, %v732
      %v734 = vpop.f32.mrf.mxu0
      %735 = vmatprep.mubr.bf16.mxu0 0
      %736 = vmatmul.mubr.bf16.gmra.mxu0 %v616
      %v737 = vpop.f32.mrf.mxu0
      %v738 = vadd.f32 0.0, %v737
      %v739 = vpop.f32.mrf.mxu0
      %v740 = vpop.f32.mrf.mxu0
      %v741 = vadd.f32 0.0, %v740
      %v742 = vpop.f32.mrf.mxu0
      %743 = vmatprep.mubr.bf16.mxu0 0
      %744 = vmatmul.mubr.bf16.gmra.mxu0 %v619
      %v745 = vpop.f32.mrf.mxu0
      %v746 = vadd.f32 0.0, %v745
      %v747 = vpop.f32.mrf.mxu0
      %v748 = vpop.f32.mrf.mxu0
      %v749 = vadd.f32 0.0, %v748
      %v750 = vpop.f32.mrf.mxu0
      %751 = vmatprep.mubr.bf16.mxu0 0
      %752 = vmatmul.mubr.bf16.gmra.mxu0 %v622
      %v753 = vpop.f32.mrf.mxu0
      %v754 = vadd.f32 0.0, %v753
      %v755 = vpop.f32.mrf.mxu0
      %v756 = vpop.f32.mrf.mxu0
      %v757 = vadd.f32 0.0, %v756
      %v758 = vpop.f32.mrf.mxu0
      %759 = vmatprep.mubr.bf16.mxu0 0
      %760 = vmatmul.mubr.bf16.gmra.mxu0 %v625
      %v761 = vpop.f32.mrf.mxu0
      %v762 = vadd.f32 0.0, %v761
      %v763 = vpop.f32.mrf.mxu0
      %v764 = vpop.f32.mrf.mxu0
      %v765 = vadd.f32 0.0, %v764
      %v766 = vpop.f32.mrf.mxu0
      %767 = vmatprep.mubr.bf16.mxu0 0
      %768 = vmatmul.mubr.bf16.gmra.mxu0 %v628
      %v769 = vpop.f32.mrf.mxu0
      %v770 = vadd.f32 0.0, %v769
      %v771 = vpop.f32.mrf.mxu0
      %v772 = vpop.f32.mrf.mxu0
      %v773 = vadd.f32 0.0, %v772
      %v774 = vpop.f32.mrf.mxu0
      %775 = vmatprep.mubr.bf16.mxu0 0
      %776 = vmatmul.mubr.bf16.gmra.mxu0 %v631
      %v777 = vpop.f32.mrf.mxu0
      %v778 = vadd.f32 0.0, %v777
      %v779 = vpop.f32.mrf.mxu0
      %v780 = vpop.f32.mrf.mxu0
      %v781 = vadd.f32 0.0, %v780
      %v782 = vpop.f32.mrf.mxu0
      %783 = vmatprep.mubr.bf16.mxu0 0
      %784 = vmatmul.mubr.bf16.gmra.mxu0 %v634
      %v785 = vpop.f32.mrf.mxu0
      %v786 = vadd.f32 0.0, %v785
      %v787 = vpop.f32.mrf.mxu0
      %v788 = vpop.f32.mrf.mxu0
      %v789 = vadd.f32 0.0, %v788
      %v790 = vpop.f32.mrf.mxu0
      %791 = vmatprep.mubr.bf16.mxu0 0
      %792 = vmatmul.mubr.bf16.gmra.mxu0 %v637
      %v793 = vpop.f32.mrf.mxu0
      %v794 = vadd.f32 0.0, %v793
      %v795 = vpop.f32.mrf.mxu0
      %v796 = vpop.f32.mrf.mxu0
      %v797 = vadd.f32 0.0, %v796
      %v798 = vpop.f32.mrf.mxu0
      %799 = vdwg.mxu0
      %v800 = vpack.c.bf16 %v677, %v674
      %v801 = vpack.c.bf16 %v685, %v682
      %v802 = vpack.c.bf16 %v693, %v690
      %v803 = vpack.c.bf16 %v701, %v698
      %v804 = vpack.c.bf16 %v709, %v706
      %v805 = vpack.c.bf16 %v717, %v714
      %v806 = vpack.c.bf16 %v725, %v722
      %v807 = vpack.c.bf16 %v733, %v730
      %v808 = vpack.c.bf16 %v741, %v738
      %v809 = vpack.c.bf16 %v749, %v746
      %v810 = vpack.c.bf16 %v757, %v754
      %v811 = vpack.c.bf16 %v765, %v762
      %v812 = vpack.c.bf16 %v773, %v770
      %v813 = vpack.c.bf16 %v781, %v778
      %v814 = vpack.c.bf16 %v789, %v786
      %v815 = vpack.c.bf16 %v797, %v794
      %v816 = vld [vmem:[%s4] sm:$0xf]
      %v817 = vld [vmem:[%s4 + $0x4] sm:$0xf]
      %v818 = vld [vmem:[%s4 + $0x8] sm:$0xf]
      %v819 = vld [vmem:[%s4 + $0xc] sm:$0xf]
      %v820 = vld [vmem:[%s4 + $0x10] sm:$0xf]
      %v821 = vld [vmem:[%s4 + $0x14] sm:$0xf]
      %v822 = vld [vmem:[%s4 + $0x18] sm:$0xf]
      %v823 = vld [vmem:[%s4 + $0x1c] sm:$0xf]
      %v828 = vunpack.c.l.b16 %v820
      %v829 = vunpack.c.l.b16 %v821
      %v830 = vunpack.c.l.b16 %v822
      %v831 = vunpack.c.l.b16 %v823
      %v832 = vpack.c.b16 %v829, %v828
      %v833 = vpack.c.b16 %v831, %v830
      %vm836 = vcmask 261120
      %v838 = vsel %vm836, %v801, 0
      %840 = vmatprep.subr.bf16.mxu0 0
      %841 = vmatpush1.bf16.msra.mxu0 0
      %842 = vmatprep.subr.bf16.mxu0 0
      %843 = vmatpush1.bf16.msra.mxu0 0
      %844 = vmatprep.subr.bf16.mxu0 0
      %845 = vmatpush1.bf16.msra.mxu0 0
      %846 = vmatprep.subr.bf16.mxu0 0
      %847 = vmatpush1.bf16.msra.mxu0 0
      %848 = vmatprep.subr.bf16.mxu0 0
      %849 = vmatpush1.bf16.msra.mxu0 0
      %850 = vmatprep.subr.bf16.mxu0 0
      %851 = vmatpush1.bf16.msra.mxu0 0
      %852 = vmatprep.subr.bf16.mxu0 0
      %853 = vmatpush1.bf16.msra.mxu0 %v833
      %854 = vmatprep.subr.bf16.mxu0 0
      %855 = vmatpush1.bf16.msra.mxu0 %v832
      %856 = vmatprep.subr.bf16.mxu0 0
      %857 = vmatpush2.bf16.msra.mxu0 0
      %858 = vmatprep.subr.bf16.mxu0 0
      %859 = vmatpush2.bf16.msra.mxu0 0
      %860 = vmatprep.subr.bf16.mxu0 0
      %861 = vmatpush2.bf16.msra.mxu0 0
      %862 = vmatprep.subr.bf16.mxu0 0
      %863 = vmatpush2.bf16.msra.mxu0 0
      %864 = vmatprep.subr.bf16.mxu0 0
      %865 = vmatpush2.bf16.msra.mxu0 0
      %866 = vmatprep.subr.bf16.mxu0 0
      %867 = vmatpush2.bf16.msra.mxu0 0
      %868 = vmatprep.subr.bf16.mxu0 0
      %869 = vmatpush2.bf16.msra.mxu0 0
      %870 = vmatprep.subr.bf16.mxu0 0
      %871 = vmatpush2.bf16.msra.mxu0 0
      %872 = vmatprep.mubr.bf16.mxu0 0
      %873 = vmatmul.mubr.bf16.gmra.mxu0 %v838
      %v874 = vpop.f32.mrf.mxu0
      %v875 = vadd.f32 0.0, %v874
      %v876 = vpop.f32.mrf.mxu0
      %v877 = vpop.f32.mrf.mxu0
      %v878 = vadd.f32 0.0, %v877
      %v879 = vpop.f32.mrf.mxu0
      %880 = vdwg.mxu0
      %v885 = vunpack.c.l.b16 %v816
      %v886 = vunpack.c.l.b16 %v817
      %v887 = vunpack.c.l.b16 %v818
      %v888 = vunpack.c.l.b16 %v819
      %v889 = vpack.c.b16 %v886, %v885
      %v890 = vpack.c.b16 %v888, %v887
      %v894 = vsel %vm836, %v800, 0
      %896 = vmatprep.subr.bf16.mxu0 0
      %897 = vmatpush1.bf16.msra.mxu0 0
      %898 = vmatprep.subr.bf16.mxu0 0
      %899 = vmatpush1.bf16.msra.mxu0 0
      %900 = vmatprep.subr.bf16.mxu0 0
      %901 = vmatpush1.bf16.msra.mxu0 0
      %902 = vmatprep.subr.bf16.mxu0 0
      %903 = vmatpush1.bf16.msra.mxu0 0
      %904 = vmatprep.subr.bf16.mxu0 0
      %905 = vmatpush1.bf16.msra.mxu0 0
      %906 = vmatprep.subr.bf16.mxu0 0
      %907 = vmatpush1.bf16.msra.mxu0 0
      %908 = vmatprep.subr.bf16.mxu0 0
      %909 = vmatpush1.bf16.msra.mxu0 %v890
      %910 = vmatprep.subr.bf16.mxu0 0
      %911 = vmatpush1.bf16.msra.mxu0 %v889
      %912 = vmatprep.subr.bf16.mxu0 0
      %913 = vmatpush2.bf16.msra.mxu0 0
      %914 = vmatprep.subr.bf16.mxu0 0
      %915 = vmatpush2.bf16.msra.mxu0 0
      %916 = vmatprep.subr.bf16.mxu0 0
      %917 = vmatpush2.bf16.msra.mxu0 0
      %918 = vmatprep.subr.bf16.mxu0 0
      %919 = vmatpush2.bf16.msra.mxu0 0
      %920 = vmatprep.subr.bf16.mxu0 0
      %921 = vmatpush2.bf16.msra.mxu0 0
      %922 = vmatprep.subr.bf16.mxu0 0
      %923 = vmatpush2.bf16.msra.mxu0 0
      %924 = vmatprep.subr.bf16.mxu0 0
      %925 = vmatpush2.bf16.msra.mxu0 0
      %926 = vmatprep.subr.bf16.mxu0 0
      %927 = vmatpush2.bf16.msra.mxu0 0
      %928 = vmatprep.mubr.bf16.mxu0 0
      %929 = vmatmul.mubr.bf16.gmra.mxu0 %v894
      %v930 = vpop.f32.mrf.mxu0
      %v931 = vadd.f32 %v875, %v930
      %v932 = vpop.f32.mrf.mxu0
      %v933 = vpop.f32.mrf.mxu0
      %v934 = vadd.f32 %v878, %v933
      %v935 = vpop.f32.mrf.mxu0
      %936 = vdwg.mxu0
      %v937 = vld [vmem:[%s4 + $0x20] sm:$0xf]
      %v938 = vld [vmem:[%s4 + $0x24] sm:$0xf]
      %v939 = vld [vmem:[%s4 + $0x28] sm:$0xf]
      %v940 = vld [vmem:[%s4 + $0x2c] sm:$0xf]
      %v945 = vunpack.c.l.b16 %v937
      %v946 = vunpack.c.l.b16 %v938
      %v947 = vunpack.c.l.b16 %v939
      %v948 = vunpack.c.l.b16 %v940
      %v949 = vpack.c.b16 %v946, %v945
      %v950 = vpack.c.b16 %v948, %v947
      %v954 = vsel %vm836, %v802, 0
      %956 = vmatprep.subr.bf16.mxu0 0
      %957 = vmatpush1.bf16.msra.mxu0 0
      %958 = vmatprep.subr.bf16.mxu0 0
      %959 = vmatpush1.bf16.msra.mxu0 0
      %960 = vmatprep.subr.bf16.mxu0 0
      %961 = vmatpush1.bf16.msra.mxu0 0
      %962 = vmatprep.subr.bf16.mxu0 0
      %963 = vmatpush1.bf16.msra.mxu0 0
      %964 = vmatprep.subr.bf16.mxu0 0
      %965 = vmatpush1.bf16.msra.mxu0 0
      %966 = vmatprep.subr.bf16.mxu0 0
      %967 = vmatpush1.bf16.msra.mxu0 0
      %968 = vmatprep.subr.bf16.mxu0 0
      %969 = vmatpush1.bf16.msra.mxu0 %v950
      %970 = vmatprep.subr.bf16.mxu0 0
      %971 = vmatpush1.bf16.msra.mxu0 %v949
      %972 = vmatprep.subr.bf16.mxu0 0
      %973 = vmatpush2.bf16.msra.mxu0 0
      %974 = vmatprep.subr.bf16.mxu0 0
      %975 = vmatpush2.bf16.msra.mxu0 0
      %976 = vmatprep.subr.bf16.mxu0 0
      %977 = vmatpush2.bf16.msra.mxu0 0
      %978 = vmatprep.subr.bf16.mxu0 0
      %979 = vmatpush2.bf16.msra.mxu0 0
      %980 = vmatprep.subr.bf16.mxu0 0
      %981 = vmatpush2.bf16.msra.mxu0 0
      %982 = vmatprep.subr.bf16.mxu0 0
      %983 = vmatpush2.bf16.msra.mxu0 0
      %984 = vmatprep.subr.bf16.mxu0 0
      %985 = vmatpush2.bf16.msra.mxu0 0
      %986 = vmatprep.subr.bf16.mxu0 0
      %987 = vmatpush2.bf16.msra.mxu0 0
      %988 = vmatprep.mubr.bf16.mxu0 0
      %989 = vmatmul.mubr.bf16.gmra.mxu0 %v954
      %v990 = vpop.f32.mrf.mxu0
      %v991 = vadd.f32 0.0, %v990
      %v992 = vpop.f32.mrf.mxu0
      %v993 = vpop.f32.mrf.mxu0
      %v994 = vadd.f32 0.0, %v993
      %v995 = vpop.f32.mrf.mxu0
      %996 = vdwg.mxu0
      %v997 = vadd.f32 %v931, %v991
      %v998 = vadd.f32 %v934, %v994
      %v999 = vld [vmem:[%s4 + $0x30] sm:$0xf]
      %v1000 = vld [vmem:[%s4 + $0x34] sm:$0xf]
      %v1001 = vld [vmem:[%s4 + $0x38] sm:$0xf]
      %v1002 = vld [vmem:[%s4 + $0x3c] sm:$0xf]
      %v1007 = vunpack.c.l.b16 %v999
      %v1008 = vunpack.c.l.b16 %v1000
      %v1009 = vunpack.c.l.b16 %v1001
      %v1010 = vunpack.c.l.b16 %v1002
      %v1011 = vpack.c.b16 %v1008, %v1007
      %v1012 = vpack.c.b16 %v1010, %v1009
      %v1016 = vsel %vm836, %v803, 0
      %1018 = vmatprep.subr.bf16.mxu0 0
      %1019 = vmatpush1.bf16.msra.mxu0 0
      %1020 = vmatprep.subr.bf16.mxu0 0
      %1021 = vmatpush1.bf16.msra.mxu0 0
      %1022 = vmatprep.subr.bf16.mxu0 0
      %1023 = vmatpush1.bf16.msra.mxu0 0
      %1024 = vmatprep.subr.bf16.mxu0 0
      %1025 = vmatpush1.bf16.msra.mxu0 0
      %1026 = vmatprep.subr.bf16.mxu0 0
      %1027 = vmatpush1.bf16.msra.mxu0 0
      %1028 = vmatprep.subr.bf16.mxu0 0
      %1029 = vmatpush1.bf16.msra.mxu0 0
      %1030 = vmatprep.subr.bf16.mxu0 0
      %1031 = vmatpush1.bf16.msra.mxu0 %v1012
      %1032 = vmatprep.subr.bf16.mxu0 0
      %1033 = vmatpush1.bf16.msra.mxu0 %v1011
      %1034 = vmatprep.subr.bf16.mxu0 0
      %1035 = vmatpush2.bf16.msra.mxu0 0
      %1036 = vmatprep.subr.bf16.mxu0 0
      %1037 = vmatpush2.bf16.msra.mxu0 0
      %1038 = vmatprep.subr.bf16.mxu0 0
      %1039 = vmatpush2.bf16.msra.mxu0 0
      %1040 = vmatprep.subr.bf16.mxu0 0
      %1041 = vmatpush2.bf16.msra.mxu0 0
      %1042 = vmatprep.subr.bf16.mxu0 0
      %1043 = vmatpush2.bf16.msra.mxu0 0
      %1044 = vmatprep.subr.bf16.mxu0 0
      %1045 = vmatpush2.bf16.msra.mxu0 0
      %1046 = vmatprep.subr.bf16.mxu0 0
      %1047 = vmatpush2.bf16.msra.mxu0 0
      %1048 = vmatprep.subr.bf16.mxu0 0
      %1049 = vmatpush2.bf16.msra.mxu0 0
      %1050 = vmatprep.mubr.bf16.mxu0 0
      %1051 = vmatmul.mubr.bf16.gmra.mxu0 %v1016
      %v1052 = vpop.f32.mrf.mxu0
      %v1053 = vadd.f32 0.0, %v1052
      %v1054 = vpop.f32.mrf.mxu0
      %v1055 = vpop.f32.mrf.mxu0
      %v1056 = vadd.f32 0.0, %v1055
      %v1057 = vpop.f32.mrf.mxu0
      %1058 = vdwg.mxu0
      %v1059 = vadd.f32 %v997, %v1053
      %v1060 = vadd.f32 %v998, %v1056
      %v1061 = vld [vmem:[%s4 + $0x40] sm:$0xf]
      %v1062 = vld [vmem:[%s4 + $0x44] sm:$0xf]
      %v1063 = vld [vmem:[%s4 + $0x48] sm:$0xf]
      %v1064 = vld [vmem:[%s4 + $0x4c] sm:$0xf]
      %v1069 = vunpack.c.l.b16 %v1061
      %v1070 = vunpack.c.l.b16 %v1062
      %v1071 = vunpack.c.l.b16 %v1063
      %v1072 = vunpack.c.l.b16 %v1064
      %v1073 = vpack.c.b16 %v1070, %v1069
      %v1074 = vpack.c.b16 %v1072, %v1071
      %v1078 = vsel %vm836, %v804, 0
      %1080 = vmatprep.subr.bf16.mxu0 0
      %1081 = vmatpush1.bf16.msra.mxu0 0
      %1082 = vmatprep.subr.bf16.mxu0 0
      %1083 = vmatpush1.bf16.msra.mxu0 0
      %1084 = vmatprep.subr.bf16.mxu0 0
      %1085 = vmatpush1.bf16.msra.mxu0 0
      %1086 = vmatprep.subr.bf16.mxu0 0
      %1087 = vmatpush1.bf16.msra.mxu0 0
      %1088 = vmatprep.subr.bf16.mxu0 0
      %1089 = vmatpush1.bf16.msra.mxu0 0
      %1090 = vmatprep.subr.bf16.mxu0 0
      %1091 = vmatpush1.bf16.msra.mxu0 0
      %1092 = vmatprep.subr.bf16.mxu0 0
      %1093 = vmatpush1.bf16.msra.mxu0 %v1074
      %1094 = vmatprep.subr.bf16.mxu0 0
      %1095 = vmatpush1.bf16.msra.mxu0 %v1073
      %1096 = vmatprep.subr.bf16.mxu0 0
      %1097 = vmatpush2.bf16.msra.mxu0 0
      %1098 = vmatprep.subr.bf16.mxu0 0
      %1099 = vmatpush2.bf16.msra.mxu0 0
      %1100 = vmatprep.subr.bf16.mxu0 0
      %1101 = vmatpush2.bf16.msra.mxu0 0
      %1102 = vmatprep.subr.bf16.mxu0 0
      %1103 = vmatpush2.bf16.msra.mxu0 0
      %1104 = vmatprep.subr.bf16.mxu0 0
      %1105 = vmatpush2.bf16.msra.mxu0 0
      %1106 = vmatprep.subr.bf16.mxu0 0
      %1107 = vmatpush2.bf16.msra.mxu0 0
      %1108 = vmatprep.subr.bf16.mxu0 0
      %1109 = vmatpush2.bf16.msra.mxu0 0
      %1110 = vmatprep.subr.bf16.mxu0 0
      %1111 = vmatpush2.bf16.msra.mxu0 0
      %1112 = vmatprep.mubr.bf16.mxu0 0
      %1113 = vmatmul.mubr.bf16.gmra.mxu0 %v1078
      %v1114 = vpop.f32.mrf.mxu0
      %v1115 = vadd.f32 0.0, %v1114
      %v1116 = vpop.f32.mrf.mxu0
      %v1117 = vpop.f32.mrf.mxu0
      %v1118 = vadd.f32 0.0, %v1117
      %v1119 = vpop.f32.mrf.mxu0
      %1120 = vdwg.mxu0
      %v1121 = vadd.f32 %v1059, %v1115
      %v1122 = vadd.f32 %v1060, %v1118
      %v1123 = vld [vmem:[%s4 + $0x50] sm:$0xf]
      %v1124 = vld [vmem:[%s4 + $0x54] sm:$0xf]
      %v1125 = vld [vmem:[%s4 + $0x58] sm:$0xf]
      %v1126 = vld [vmem:[%s4 + $0x5c] sm:$0xf]
      %v1131 = vunpack.c.l.b16 %v1123
      %v1132 = vunpack.c.l.b16 %v1124
      %v1133 = vunpack.c.l.b16 %v1125
      %v1134 = vunpack.c.l.b16 %v1126
      %v1135 = vpack.c.b16 %v1132, %v1131
      %v1136 = vpack.c.b16 %v1134, %v1133
      %v1140 = vsel %vm836, %v805, 0
      %1142 = vmatprep.subr.bf16.mxu0 0
      %1143 = vmatpush1.bf16.msra.mxu0 0
      %1144 = vmatprep.subr.bf16.mxu0 0
      %1145 = vmatpush1.bf16.msra.mxu0 0
      %1146 = vmatprep.subr.bf16.mxu0 0
      %1147 = vmatpush1.bf16.msra.mxu0 0
      %1148 = vmatprep.subr.bf16.mxu0 0
      %1149 = vmatpush1.bf16.msra.mxu0 0
      %1150 = vmatprep.subr.bf16.mxu0 0
      %1151 = vmatpush1.bf16.msra.mxu0 0
      %1152 = vmatprep.subr.bf16.mxu0 0
      %1153 = vmatpush1.bf16.msra.mxu0 0
      %1154 = vmatprep.subr.bf16.mxu0 0
      %1155 = vmatpush1.bf16.msra.mxu0 %v1136
      %1156 = vmatprep.subr.bf16.mxu0 0
      %1157 = vmatpush1.bf16.msra.mxu0 %v1135
      %1158 = vmatprep.subr.bf16.mxu0 0
      %1159 = vmatpush2.bf16.msra.mxu0 0
      %1160 = vmatprep.subr.bf16.mxu0 0
      %1161 = vmatpush2.bf16.msra.mxu0 0
      %1162 = vmatprep.subr.bf16.mxu0 0
      %1163 = vmatpush2.bf16.msra.mxu0 0
      %1164 = vmatprep.subr.bf16.mxu0 0
      %1165 = vmatpush2.bf16.msra.mxu0 0
      %1166 = vmatprep.subr.bf16.mxu0 0
      %1167 = vmatpush2.bf16.msra.mxu0 0
      %1168 = vmatprep.subr.bf16.mxu0 0
      %1169 = vmatpush2.bf16.msra.mxu0 0
      %1170 = vmatprep.subr.bf16.mxu0 0
      %1171 = vmatpush2.bf16.msra.mxu0 0
      %1172 = vmatprep.subr.bf16.mxu0 0
      %1173 = vmatpush2.bf16.msra.mxu0 0
      %1174 = vmatprep.mubr.bf16.mxu0 0
      %1175 = vmatmul.mubr.bf16.gmra.mxu0 %v1140
      %v1176 = vpop.f32.mrf.mxu0
      %v1177 = vadd.f32 0.0, %v1176
      %v1178 = vpop.f32.mrf.mxu0
      %v1179 = vpop.f32.mrf.mxu0
      %v1180 = vadd.f32 0.0, %v1179
      %v1181 = vpop.f32.mrf.mxu0
      %1182 = vdwg.mxu0
      %v1183 = vadd.f32 %v1121, %v1177
      %v1184 = vadd.f32 %v1122, %v1180
      %v1185 = vld [vmem:[%s4 + $0x60] sm:$0xf]
      %v1186 = vld [vmem:[%s4 + $0x64] sm:$0xf]
      %v1187 = vld [vmem:[%s4 + $0x68] sm:$0xf]
      %v1188 = vld [vmem:[%s4 + $0x6c] sm:$0xf]
      %v1193 = vunpack.c.l.b16 %v1185
      %v1194 = vunpack.c.l.b16 %v1186
      %v1195 = vunpack.c.l.b16 %v1187
      %v1196 = vunpack.c.l.b16 %v1188
      %v1197 = vpack.c.b16 %v1194, %v1193
      %v1198 = vpack.c.b16 %v1196, %v1195
      %v1202 = vsel %vm836, %v806, 0
      %1204 = vmatprep.subr.bf16.mxu0 0
      %1205 = vmatpush1.bf16.msra.mxu0 0
      %1206 = vmatprep.subr.bf16.mxu0 0
      %1207 = vmatpush1.bf16.msra.mxu0 0
      %1208 = vmatprep.subr.bf16.mxu0 0
      %1209 = vmatpush1.bf16.msra.mxu0 0
      %1210 = vmatprep.subr.bf16.mxu0 0
      %1211 = vmatpush1.bf16.msra.mxu0 0
      %1212 = vmatprep.subr.bf16.mxu0 0
      %1213 = vmatpush1.bf16.msra.mxu0 0
      %1214 = vmatprep.subr.bf16.mxu0 0
      %1215 = vmatpush1.bf16.msra.mxu0 0
      %1216 = vmatprep.subr.bf16.mxu0 0
      %1217 = vmatpush1.bf16.msra.mxu0 %v1198
      %1218 = vmatprep.subr.bf16.mxu0 0
      %1219 = vmatpush1.bf16.msra.mxu0 %v1197
      %1220 = vmatprep.subr.bf16.mxu0 0
      %1221 = vmatpush2.bf16.msra.mxu0 0
      %1222 = vmatprep.subr.bf16.mxu0 0
      %1223 = vmatpush2.bf16.msra.mxu0 0
      %1224 = vmatprep.subr.bf16.mxu0 0
      %1225 = vmatpush2.bf16.msra.mxu0 0
      %1226 = vmatprep.subr.bf16.mxu0 0
      %1227 = vmatpush2.bf16.msra.mxu0 0
      %1228 = vmatprep.subr.bf16.mxu0 0
      %1229 = vmatpush2.bf16.msra.mxu0 0
      %1230 = vmatprep.subr.bf16.mxu0 0
      %1231 = vmatpush2.bf16.msra.mxu0 0
      %1232 = vmatprep.subr.bf16.mxu0 0
      %1233 = vmatpush2.bf16.msra.mxu0 0
      %1234 = vmatprep.subr.bf16.mxu0 0
      %1235 = vmatpush2.bf16.msra.mxu0 0
      %1236 = vmatprep.mubr.bf16.mxu0 0
      %1237 = vmatmul.mubr.bf16.gmra.mxu0 %v1202
      %v1238 = vpop.f32.mrf.mxu0
      %v1239 = vadd.f32 0.0, %v1238
      %v1240 = vpop.f32.mrf.mxu0
      %v1241 = vpop.f32.mrf.mxu0
      %v1242 = vadd.f32 0.0, %v1241
      %v1243 = vpop.f32.mrf.mxu0
      %1244 = vdwg.mxu0
      %v1245 = vadd.f32 %v1183, %v1239
      %v1246 = vadd.f32 %v1184, %v1242
      %v1247 = vld [vmem:[%s4 + $0x70] sm:$0xf]
      %v1248 = vld [vmem:[%s4 + $0x74] sm:$0xf]
      %v1249 = vld [vmem:[%s4 + $0x78] sm:$0xf]
      %v1250 = vld [vmem:[%s4 + $0x7c] sm:$0xf]
      %v1255 = vunpack.c.l.b16 %v1247
      %v1256 = vunpack.c.l.b16 %v1248
      %v1257 = vunpack.c.l.b16 %v1249
      %v1258 = vunpack.c.l.b16 %v1250
      %v1259 = vpack.c.b16 %v1256, %v1255
      %v1260 = vpack.c.b16 %v1258, %v1257
      %v1264 = vsel %vm836, %v807, 0
      %1266 = vmatprep.subr.bf16.mxu0 0
      %1267 = vmatpush1.bf16.msra.mxu0 0
      %1268 = vmatprep.subr.bf16.mxu0 0
      %1269 = vmatpush1.bf16.msra.mxu0 0
      %1270 = vmatprep.subr.bf16.mxu0 0
      %1271 = vmatpush1.bf16.msra.mxu0 0
      %1272 = vmatprep.subr.bf16.mxu0 0
      %1273 = vmatpush1.bf16.msra.mxu0 0
      %1274 = vmatprep.subr.bf16.mxu0 0
      %1275 = vmatpush1.bf16.msra.mxu0 0
      %1276 = vmatprep.subr.bf16.mxu0 0
      %1277 = vmatpush1.bf16.msra.mxu0 0
      %1278 = vmatprep.subr.bf16.mxu0 0
      %1279 = vmatpush1.bf16.msra.mxu0 %v1260
      %1280 = vmatprep.subr.bf16.mxu0 0
      %1281 = vmatpush1.bf16.msra.mxu0 %v1259
      %1282 = vmatprep.subr.bf16.mxu0 0
      %1283 = vmatpush2.bf16.msra.mxu0 0
      %1284 = vmatprep.subr.bf16.mxu0 0
      %1285 = vmatpush2.bf16.msra.mxu0 0
      %1286 = vmatprep.subr.bf16.mxu0 0
      %1287 = vmatpush2.bf16.msra.mxu0 0
      %1288 = vmatprep.subr.bf16.mxu0 0
      %1289 = vmatpush2.bf16.msra.mxu0 0
      %1290 = vmatprep.subr.bf16.mxu0 0
      %1291 = vmatpush2.bf16.msra.mxu0 0
      %1292 = vmatprep.subr.bf16.mxu0 0
      %1293 = vmatpush2.bf16.msra.mxu0 0
      %1294 = vmatprep.subr.bf16.mxu0 0
      %1295 = vmatpush2.bf16.msra.mxu0 0
      %1296 = vmatprep.subr.bf16.mxu0 0
      %1297 = vmatpush2.bf16.msra.mxu0 0
      %1298 = vmatprep.mubr.bf16.mxu0 0
      %1299 = vmatmul.mubr.bf16.gmra.mxu0 %v1264
      %v1300 = vpop.f32.mrf.mxu0
      %v1301 = vadd.f32 0.0, %v1300
      %v1302 = vpop.f32.mrf.mxu0
      %v1303 = vpop.f32.mrf.mxu0
      %v1304 = vadd.f32 0.0, %v1303
      %v1305 = vpop.f32.mrf.mxu0
      %1306 = vdwg.mxu0
      %v1307 = vadd.f32 %v1245, %v1301
      %v1308 = vadd.f32 %v1246, %v1304
      %v1309 = vld [vmem:[%s4 + $0x80] sm:$0xf]
      %v1310 = vld [vmem:[%s4 + $0x84] sm:$0xf]
      %v1311 = vld [vmem:[%s4 + $0x88] sm:$0xf]
      %v1312 = vld [vmem:[%s4 + $0x8c] sm:$0xf]
      %v1317 = vunpack.c.l.b16 %v1309
      %v1318 = vunpack.c.l.b16 %v1310
      %v1319 = vunpack.c.l.b16 %v1311
      %v1320 = vunpack.c.l.b16 %v1312
      %v1321 = vpack.c.b16 %v1318, %v1317
      %v1322 = vpack.c.b16 %v1320, %v1319
      %v1326 = vsel %vm836, %v808, 0
      %1328 = vmatprep.subr.bf16.mxu0 0
      %1329 = vmatpush1.bf16.msra.mxu0 0
      %1330 = vmatprep.subr.bf16.mxu0 0
      %1331 = vmatpush1.bf16.msra.mxu0 0
      %1332 = vmatprep.subr.bf16.mxu0 0
      %1333 = vmatpush1.bf16.msra.mxu0 0
      %1334 = vmatprep.subr.bf16.mxu0 0
      %1335 = vmatpush1.bf16.msra.mxu0 0
      %1336 = vmatprep.subr.bf16.mxu0 0
      %1337 = vmatpush1.bf16.msra.mxu0 0
      %1338 = vmatprep.subr.bf16.mxu0 0
      %1339 = vmatpush1.bf16.msra.mxu0 0
      %1340 = vmatprep.subr.bf16.mxu0 0
      %1341 = vmatpush1.bf16.msra.mxu0 %v1322
      %1342 = vmatprep.subr.bf16.mxu0 0
      %1343 = vmatpush1.bf16.msra.mxu0 %v1321
      %1344 = vmatprep.subr.bf16.mxu0 0
      %1345 = vmatpush2.bf16.msra.mxu0 0
      %1346 = vmatprep.subr.bf16.mxu0 0
      %1347 = vmatpush2.bf16.msra.mxu0 0
      %1348 = vmatprep.subr.bf16.mxu0 0
      %1349 = vmatpush2.bf16.msra.mxu0 0
      %1350 = vmatprep.subr.bf16.mxu0 0
      %1351 = vmatpush2.bf16.msra.mxu0 0
      %1352 = vmatprep.subr.bf16.mxu0 0
      %1353 = vmatpush2.bf16.msra.mxu0 0
      %1354 = vmatprep.subr.bf16.mxu0 0
      %1355 = vmatpush2.bf16.msra.mxu0 0
      %1356 = vmatprep.subr.bf16.mxu0 0
      %1357 = vmatpush2.bf16.msra.mxu0 0
      %1358 = vmatprep.subr.bf16.mxu0 0
      %1359 = vmatpush2.bf16.msra.mxu0 0
      %1360 = vmatprep.mubr.bf16.mxu0 0
      %1361 = vmatmul.mubr.bf16.gmra.mxu0 %v1326
      %v1362 = vpop.f32.mrf.mxu0
      %v1363 = vadd.f32 0.0, %v1362
      %v1364 = vpop.f32.mrf.mxu0
      %v1365 = vpop.f32.mrf.mxu0
      %v1366 = vadd.f32 0.0, %v1365
      %v1367 = vpop.f32.mrf.mxu0
      %1368 = vdwg.mxu0
      %v1369 = vadd.f32 %v1307, %v1363
      %v1370 = vadd.f32 %v1308, %v1366
      %v1371 = vld [vmem:[%s4 + $0x90] sm:$0xf]
      %v1372 = vld [vmem:[%s4 + $0x94] sm:$0xf]
      %v1373 = vld [vmem:[%s4 + $0x98] sm:$0xf]
      %v1374 = vld [vmem:[%s4 + $0x9c] sm:$0xf]
      %v1379 = vunpack.c.l.b16 %v1371
      %v1380 = vunpack.c.l.b16 %v1372
      %v1381 = vunpack.c.l.b16 %v1373
      %v1382 = vunpack.c.l.b16 %v1374
      %v1383 = vpack.c.b16 %v1380, %v1379
      %v1384 = vpack.c.b16 %v1382, %v1381
      %v1388 = vsel %vm836, %v809, 0
      %1390 = vmatprep.subr.bf16.mxu0 0
      %1391 = vmatpush1.bf16.msra.mxu0 0
      %1392 = vmatprep.subr.bf16.mxu0 0
      %1393 = vmatpush1.bf16.msra.mxu0 0
      %1394 = vmatprep.subr.bf16.mxu0 0
      %1395 = vmatpush1.bf16.msra.mxu0 0
      %1396 = vmatprep.subr.bf16.mxu0 0
      %1397 = vmatpush1.bf16.msra.mxu0 0
      %1398 = vmatprep.subr.bf16.mxu0 0
      %1399 = vmatpush1.bf16.msra.mxu0 0
      %1400 = vmatprep.subr.bf16.mxu0 0
      %1401 = vmatpush1.bf16.msra.mxu0 0
      %1402 = vmatprep.subr.bf16.mxu0 0
      %1403 = vmatpush1.bf16.msra.mxu0 %v1384
      %1404 = vmatprep.subr.bf16.mxu0 0
      %1405 = vmatpush1.bf16.msra.mxu0 %v1383
      %1406 = vmatprep.subr.bf16.mxu0 0
      %1407 = vmatpush2.bf16.msra.mxu0 0
      %1408 = vmatprep.subr.bf16.mxu0 0
      %1409 = vmatpush2.bf16.msra.mxu0 0
      %1410 = vmatprep.subr.bf16.mxu0 0
      %1411 = vmatpush2.bf16.msra.mxu0 0
      %1412 = vmatprep.subr.bf16.mxu0 0
      %1413 = vmatpush2.bf16.msra.mxu0 0
      %1414 = vmatprep.subr.bf16.mxu0 0
      %1415 = vmatpush2.bf16.msra.mxu0 0
      %1416 = vmatprep.subr.bf16.mxu0 0
      %1417 = vmatpush2.bf16.msra.mxu0 0
      %1418 = vmatprep.subr.bf16.mxu0 0
      %1419 = vmatpush2.bf16.msra.mxu0 0
      %1420 = vmatprep.subr.bf16.mxu0 0
      %1421 = vmatpush2.bf16.msra.mxu0 0
      %1422 = vmatprep.mubr.bf16.mxu0 0
      %1423 = vmatmul.mubr.bf16.gmra.mxu0 %v1388
      %v1424 = vpop.f32.mrf.mxu0
      %v1425 = vadd.f32 0.0, %v1424
      %v1426 = vpop.f32.mrf.mxu0
      %v1427 = vpop.f32.mrf.mxu0
      %v1428 = vadd.f32 0.0, %v1427
      %v1429 = vpop.f32.mrf.mxu0
      %1430 = vdwg.mxu0
      %v1431 = vadd.f32 %v1369, %v1425
      %v1432 = vadd.f32 %v1370, %v1428
      %v1433 = vld [vmem:[%s4 + $0xa0] sm:$0xf]
      %v1434 = vld [vmem:[%s4 + $0xa4] sm:$0xf]
      %v1435 = vld [vmem:[%s4 + $0xa8] sm:$0xf]
      %v1436 = vld [vmem:[%s4 + $0xac] sm:$0xf]
      %v1441 = vunpack.c.l.b16 %v1433
      %v1442 = vunpack.c.l.b16 %v1434
      %v1443 = vunpack.c.l.b16 %v1435
      %v1444 = vunpack.c.l.b16 %v1436
      %v1445 = vpack.c.b16 %v1442, %v1441
      %v1446 = vpack.c.b16 %v1444, %v1443
      %v1450 = vsel %vm836, %v810, 0
      %1452 = vmatprep.subr.bf16.mxu0 0
      %1453 = vmatpush1.bf16.msra.mxu0 0
      %1454 = vmatprep.subr.bf16.mxu0 0
      %1455 = vmatpush1.bf16.msra.mxu0 0
      %1456 = vmatprep.subr.bf16.mxu0 0
      %1457 = vmatpush1.bf16.msra.mxu0 0
      %1458 = vmatprep.subr.bf16.mxu0 0
      %1459 = vmatpush1.bf16.msra.mxu0 0
      %1460 = vmatprep.subr.bf16.mxu0 0
      %1461 = vmatpush1.bf16.msra.mxu0 0
      %1462 = vmatprep.subr.bf16.mxu0 0
      %1463 = vmatpush1.bf16.msra.mxu0 0
      %1464 = vmatprep.subr.bf16.mxu0 0
      %1465 = vmatpush1.bf16.msra.mxu0 %v1446
      %1466 = vmatprep.subr.bf16.mxu0 0
      %1467 = vmatpush1.bf16.msra.mxu0 %v1445
      %1468 = vmatprep.subr.bf16.mxu0 0
      %1469 = vmatpush2.bf16.msra.mxu0 0
      %1470 = vmatprep.subr.bf16.mxu0 0
      %1471 = vmatpush2.bf16.msra.mxu0 0
      %1472 = vmatprep.subr.bf16.mxu0 0
      %1473 = vmatpush2.bf16.msra.mxu0 0
      %1474 = vmatprep.subr.bf16.mxu0 0
      %1475 = vmatpush2.bf16.msra.mxu0 0
      %1476 = vmatprep.subr.bf16.mxu0 0
      %1477 = vmatpush2.bf16.msra.mxu0 0
      %1478 = vmatprep.subr.bf16.mxu0 0
      %1479 = vmatpush2.bf16.msra.mxu0 0
      %1480 = vmatprep.subr.bf16.mxu0 0
      %1481 = vmatpush2.bf16.msra.mxu0 0
      %1482 = vmatprep.subr.bf16.mxu0 0
      %1483 = vmatpush2.bf16.msra.mxu0 0
      %1484 = vmatprep.mubr.bf16.mxu0 0
      %1485 = vmatmul.mubr.bf16.gmra.mxu0 %v1450
      %v1486 = vpop.f32.mrf.mxu0
      %v1487 = vadd.f32 0.0, %v1486
      %v1488 = vpop.f32.mrf.mxu0
      %v1489 = vpop.f32.mrf.mxu0
      %v1490 = vadd.f32 0.0, %v1489
      %v1491 = vpop.f32.mrf.mxu0
      %1492 = vdwg.mxu0
      %v1493 = vadd.f32 %v1431, %v1487
      %v1494 = vadd.f32 %v1432, %v1490
      %v1495 = vld [vmem:[%s4 + $0xb0] sm:$0xf]
      %v1496 = vld [vmem:[%s4 + $0xb4] sm:$0xf]
      %v1497 = vld [vmem:[%s4 + $0xb8] sm:$0xf]
      %v1498 = vld [vmem:[%s4 + $0xbc] sm:$0xf]
      %v1503 = vunpack.c.l.b16 %v1495
      %v1504 = vunpack.c.l.b16 %v1496
      %v1505 = vunpack.c.l.b16 %v1497
      %v1506 = vunpack.c.l.b16 %v1498
      %v1507 = vpack.c.b16 %v1504, %v1503
      %v1508 = vpack.c.b16 %v1506, %v1505
      %v1512 = vsel %vm836, %v811, 0
      %1514 = vmatprep.subr.bf16.mxu0 0
      %1515 = vmatpush1.bf16.msra.mxu0 0
      %1516 = vmatprep.subr.bf16.mxu0 0
      %1517 = vmatpush1.bf16.msra.mxu0 0
      %1518 = vmatprep.subr.bf16.mxu0 0
      %1519 = vmatpush1.bf16.msra.mxu0 0
      %1520 = vmatprep.subr.bf16.mxu0 0
      %1521 = vmatpush1.bf16.msra.mxu0 0
      %1522 = vmatprep.subr.bf16.mxu0 0
      %1523 = vmatpush1.bf16.msra.mxu0 0
      %1524 = vmatprep.subr.bf16.mxu0 0
      %1525 = vmatpush1.bf16.msra.mxu0 0
      %1526 = vmatprep.subr.bf16.mxu0 0
      %1527 = vmatpush1.bf16.msra.mxu0 %v1508
      %1528 = vmatprep.subr.bf16.mxu0 0
      %1529 = vmatpush1.bf16.msra.mxu0 %v1507
      %1530 = vmatprep.subr.bf16.mxu0 0
      %1531 = vmatpush2.bf16.msra.mxu0 0
      %1532 = vmatprep.subr.bf16.mxu0 0
      %1533 = vmatpush2.bf16.msra.mxu0 0
      %1534 = vmatprep.subr.bf16.mxu0 0
      %1535 = vmatpush2.bf16.msra.mxu0 0
      %1536 = vmatprep.subr.bf16.mxu0 0
      %1537 = vmatpush2.bf16.msra.mxu0 0
      %1538 = vmatprep.subr.bf16.mxu0 0
      %1539 = vmatpush2.bf16.msra.mxu0 0
      %1540 = vmatprep.subr.bf16.mxu0 0
      %1541 = vmatpush2.bf16.msra.mxu0 0
      %1542 = vmatprep.subr.bf16.mxu0 0
      %1543 = vmatpush2.bf16.msra.mxu0 0
      %1544 = vmatprep.subr.bf16.mxu0 0
      %1545 = vmatpush2.bf16.msra.mxu0 0
      %1546 = vmatprep.mubr.bf16.mxu0 0
      %1547 = vmatmul.mubr.bf16.gmra.mxu0 %v1512
      %v1548 = vpop.f32.mrf.mxu0
      %v1549 = vadd.f32 0.0, %v1548
      %v1550 = vpop.f32.mrf.mxu0
      %v1551 = vpop.f32.mrf.mxu0
      %v1552 = vadd.f32 0.0, %v1551
      %v1553 = vpop.f32.mrf.mxu0
      %1554 = vdwg.mxu0
      %v1555 = vadd.f32 %v1493, %v1549
      %v1556 = vadd.f32 %v1494, %v1552
      %v1557 = vld [vmem:[%s4 + $0xc0] sm:$0xf]
      %v1558 = vld [vmem:[%s4 + $0xc4] sm:$0xf]
      %v1559 = vld [vmem:[%s4 + $0xc8] sm:$0xf]
      %v1560 = vld [vmem:[%s4 + $0xcc] sm:$0xf]
      %v1565 = vunpack.c.l.b16 %v1557
      %v1566 = vunpack.c.l.b16 %v1558
      %v1567 = vunpack.c.l.b16 %v1559
      %v1568 = vunpack.c.l.b16 %v1560
      %v1569 = vpack.c.b16 %v1566, %v1565
      %v1570 = vpack.c.b16 %v1568, %v1567
      %v1574 = vsel %vm836, %v812, 0
      %1576 = vmatprep.subr.bf16.mxu0 0
      %1577 = vmatpush1.bf16.msra.mxu0 0
      %1578 = vmatprep.subr.bf16.mxu0 0
      %1579 = vmatpush1.bf16.msra.mxu0 0
      %1580 = vmatprep.subr.bf16.mxu0 0
      %1581 = vmatpush1.bf16.msra.mxu0 0
      %1582 = vmatprep.subr.bf16.mxu0 0
      %1583 = vmatpush1.bf16.msra.mxu0 0
      %1584 = vmatprep.subr.bf16.mxu0 0
      %1585 = vmatpush1.bf16.msra.mxu0 0
      %1586 = vmatprep.subr.bf16.mxu0 0
      %1587 = vmatpush1.bf16.msra.mxu0 0
      %1588 = vmatprep.subr.bf16.mxu0 0
      %1589 = vmatpush1.bf16.msra.mxu0 %v1570
      %1590 = vmatprep.subr.bf16.mxu0 0
      %1591 = vmatpush1.bf16.msra.mxu0 %v1569
      %1592 = vmatprep.subr.bf16.mxu0 0
      %1593 = vmatpush2.bf16.msra.mxu0 0
      %1594 = vmatprep.subr.bf16.mxu0 0
      %1595 = vmatpush2.bf16.msra.mxu0 0
      %1596 = vmatprep.subr.bf16.mxu0 0
      %1597 = vmatpush2.bf16.msra.mxu0 0
      %1598 = vmatprep.subr.bf16.mxu0 0
      %1599 = vmatpush2.bf16.msra.mxu0 0
      %1600 = vmatprep.subr.bf16.mxu0 0
      %1601 = vmatpush2.bf16.msra.mxu0 0
      %1602 = vmatprep.subr.bf16.mxu0 0
      %1603 = vmatpush2.bf16.msra.mxu0 0
      %1604 = vmatprep.subr.bf16.mxu0 0
      %1605 = vmatpush2.bf16.msra.mxu0 0
      %1606 = vmatprep.subr.bf16.mxu0 0
      %1607 = vmatpush2.bf16.msra.mxu0 0
      %1608 = vmatprep.mubr.bf16.mxu0 0
      %1609 = vmatmul.mubr.bf16.gmra.mxu0 %v1574
      %v1610 = vpop.f32.mrf.mxu0
      %v1611 = vadd.f32 0.0, %v1610
      %v1612 = vpop.f32.mrf.mxu0
      %v1613 = vpop.f32.mrf.mxu0
      %v1614 = vadd.f32 0.0, %v1613
      %v1615 = vpop.f32.mrf.mxu0
      %1616 = vdwg.mxu0
      %v1617 = vadd.f32 %v1555, %v1611
      %v1618 = vadd.f32 %v1556, %v1614
      %v1619 = vld [vmem:[%s4 + $0xd0] sm:$0xf]
      %v1620 = vld [vmem:[%s4 + $0xd4] sm:$0xf]
      %v1621 = vld [vmem:[%s4 + $0xd8] sm:$0xf]
      %v1622 = vld [vmem:[%s4 + $0xdc] sm:$0xf]
      %v1627 = vunpack.c.l.b16 %v1619
      %v1628 = vunpack.c.l.b16 %v1620
      %v1629 = vunpack.c.l.b16 %v1621
      %v1630 = vunpack.c.l.b16 %v1622
      %v1631 = vpack.c.b16 %v1628, %v1627
      %v1632 = vpack.c.b16 %v1630, %v1629
      %v1636 = vsel %vm836, %v813, 0
      %1638 = vmatprep.subr.bf16.mxu0 0
      %1639 = vmatpush1.bf16.msra.mxu0 0
      %1640 = vmatprep.subr.bf16.mxu0 0
      %1641 = vmatpush1.bf16.msra.mxu0 0
      %1642 = vmatprep.subr.bf16.mxu0 0
      %1643 = vmatpush1.bf16.msra.mxu0 0
      %1644 = vmatprep.subr.bf16.mxu0 0
      %1645 = vmatpush1.bf16.msra.mxu0 0
      %1646 = vmatprep.subr.bf16.mxu0 0
      %1647 = vmatpush1.bf16.msra.mxu0 0
      %1648 = vmatprep.subr.bf16.mxu0 0
      %1649 = vmatpush1.bf16.msra.mxu0 0
      %1650 = vmatprep.subr.bf16.mxu0 0
      %1651 = vmatpush1.bf16.msra.mxu0 %v1632
      %1652 = vmatprep.subr.bf16.mxu0 0
      %1653 = vmatpush1.bf16.msra.mxu0 %v1631
      %1654 = vmatprep.subr.bf16.mxu0 0
      %1655 = vmatpush2.bf16.msra.mxu0 0
      %1656 = vmatprep.subr.bf16.mxu0 0
      %1657 = vmatpush2.bf16.msra.mxu0 0
      %1658 = vmatprep.subr.bf16.mxu0 0
      %1659 = vmatpush2.bf16.msra.mxu0 0
      %1660 = vmatprep.subr.bf16.mxu0 0
      %1661 = vmatpush2.bf16.msra.mxu0 0
      %1662 = vmatprep.subr.bf16.mxu0 0
      %1663 = vmatpush2.bf16.msra.mxu0 0
      %1664 = vmatprep.subr.bf16.mxu0 0
      %1665 = vmatpush2.bf16.msra.mxu0 0
      %1666 = vmatprep.subr.bf16.mxu0 0
      %1667 = vmatpush2.bf16.msra.mxu0 0
      %1668 = vmatprep.subr.bf16.mxu0 0
      %1669 = vmatpush2.bf16.msra.mxu0 0
      %1670 = vmatprep.mubr.bf16.mxu0 0
      %1671 = vmatmul.mubr.bf16.gmra.mxu0 %v1636
      %v1672 = vpop.f32.mrf.mxu0
      %v1673 = vadd.f32 0.0, %v1672
      %v1674 = vpop.f32.mrf.mxu0
      %v1675 = vpop.f32.mrf.mxu0
      %v1676 = vadd.f32 0.0, %v1675
      %v1677 = vpop.f32.mrf.mxu0
      %1678 = vdwg.mxu0
      %v1679 = vadd.f32 %v1617, %v1673
      %v1680 = vadd.f32 %v1618, %v1676
      %v1681 = vld [vmem:[%s4 + $0xe0] sm:$0xf]
      %v1682 = vld [vmem:[%s4 + $0xe4] sm:$0xf]
      %v1683 = vld [vmem:[%s4 + $0xe8] sm:$0xf]
      %v1684 = vld [vmem:[%s4 + $0xec] sm:$0xf]
      %v1689 = vunpack.c.l.b16 %v1681
      %v1690 = vunpack.c.l.b16 %v1682
      %v1691 = vunpack.c.l.b16 %v1683
      %v1692 = vunpack.c.l.b16 %v1684
      %v1693 = vpack.c.b16 %v1690, %v1689
      %v1694 = vpack.c.b16 %v1692, %v1691
      %v1698 = vsel %vm836, %v814, 0
      %1700 = vmatprep.subr.bf16.mxu0 0
      %1701 = vmatpush1.bf16.msra.mxu0 0
      %1702 = vmatprep.subr.bf16.mxu0 0
      %1703 = vmatpush1.bf16.msra.mxu0 0
      %1704 = vmatprep.subr.bf16.mxu0 0
      %1705 = vmatpush1.bf16.msra.mxu0 0
      %1706 = vmatprep.subr.bf16.mxu0 0
      %1707 = vmatpush1.bf16.msra.mxu0 0
      %1708 = vmatprep.subr.bf16.mxu0 0
      %1709 = vmatpush1.bf16.msra.mxu0 0
      %1710 = vmatprep.subr.bf16.mxu0 0
      %1711 = vmatpush1.bf16.msra.mxu0 0
      %1712 = vmatprep.subr.bf16.mxu0 0
      %1713 = vmatpush1.bf16.msra.mxu0 %v1694
      %1714 = vmatprep.subr.bf16.mxu0 0
      %1715 = vmatpush1.bf16.msra.mxu0 %v1693
      %1716 = vmatprep.subr.bf16.mxu0 0
      %1717 = vmatpush2.bf16.msra.mxu0 0
      %1718 = vmatprep.subr.bf16.mxu0 0
      %1719 = vmatpush2.bf16.msra.mxu0 0
      %1720 = vmatprep.subr.bf16.mxu0 0
      %1721 = vmatpush2.bf16.msra.mxu0 0
      %1722 = vmatprep.subr.bf16.mxu0 0
      %1723 = vmatpush2.bf16.msra.mxu0 0
      %1724 = vmatprep.subr.bf16.mxu0 0
      %1725 = vmatpush2.bf16.msra.mxu0 0
      %1726 = vmatprep.subr.bf16.mxu0 0
      %1727 = vmatpush2.bf16.msra.mxu0 0
      %1728 = vmatprep.subr.bf16.mxu0 0
      %1729 = vmatpush2.bf16.msra.mxu0 0
      %1730 = vmatprep.subr.bf16.mxu0 0
      %1731 = vmatpush2.bf16.msra.mxu0 0
      %1732 = vmatprep.mubr.bf16.mxu0 0
      %1733 = vmatmul.mubr.bf16.gmra.mxu0 %v1698
      %v1734 = vpop.f32.mrf.mxu0
      %v1735 = vadd.f32 0.0, %v1734
      %v1736 = vpop.f32.mrf.mxu0
      %v1737 = vpop.f32.mrf.mxu0
      %v1738 = vadd.f32 0.0, %v1737
      %v1739 = vpop.f32.mrf.mxu0
      %1740 = vdwg.mxu0
      %v1741 = vadd.f32 %v1679, %v1735
      %v1742 = vadd.f32 %v1680, %v1738
      %v1743 = vld [vmem:[%s4 + $0xf0] sm:$0xf]
      %v1744 = vld [vmem:[%s4 + $0xf4] sm:$0xf]
      %v1745 = vld [vmem:[%s4 + $0xf8] sm:$0xf]
      %v1746 = vld [vmem:[%s4 + $0xfc] sm:$0xf]
      %v1751 = vunpack.c.l.b16 %v1743
      %v1752 = vunpack.c.l.b16 %v1744
      %v1753 = vunpack.c.l.b16 %v1745
      %v1754 = vunpack.c.l.b16 %v1746
      %v1755 = vpack.c.b16 %v1752, %v1751
      %v1756 = vpack.c.b16 %v1754, %v1753
      %v1760 = vsel %vm836, %v815, 0
      %1762 = vmatprep.subr.bf16.mxu0 0
      %1763 = vmatpush1.bf16.msra.mxu0 0
      %1764 = vmatprep.subr.bf16.mxu0 0
      %1765 = vmatpush1.bf16.msra.mxu0 0
      %1766 = vmatprep.subr.bf16.mxu0 0
      %1767 = vmatpush1.bf16.msra.mxu0 0
      %1768 = vmatprep.subr.bf16.mxu0 0
      %1769 = vmatpush1.bf16.msra.mxu0 0
      %1770 = vmatprep.subr.bf16.mxu0 0
      %1771 = vmatpush1.bf16.msra.mxu0 0
      %1772 = vmatprep.subr.bf16.mxu0 0
      %1773 = vmatpush1.bf16.msra.mxu0 0
      %1774 = vmatprep.subr.bf16.mxu0 0
      %1775 = vmatpush1.bf16.msra.mxu0 %v1756
      %1776 = vmatprep.subr.bf16.mxu0 0
      %1777 = vmatpush1.bf16.msra.mxu0 %v1755
      %1778 = vmatprep.subr.bf16.mxu0 0
      %1779 = vmatpush2.bf16.msra.mxu0 0
      %1780 = vmatprep.subr.bf16.mxu0 0
      %1781 = vmatpush2.bf16.msra.mxu0 0
      %1782 = vmatprep.subr.bf16.mxu0 0
      %1783 = vmatpush2.bf16.msra.mxu0 0
      %1784 = vmatprep.subr.bf16.mxu0 0
      %1785 = vmatpush2.bf16.msra.mxu0 0
      %1786 = vmatprep.subr.bf16.mxu0 0
      %1787 = vmatpush2.bf16.msra.mxu0 0
      %1788 = vmatprep.subr.bf16.mxu0 0
      %1789 = vmatpush2.bf16.msra.mxu0 0
      %1790 = vmatprep.subr.bf16.mxu0 0
      %1791 = vmatpush2.bf16.msra.mxu0 0
      %1792 = vmatprep.subr.bf16.mxu0 0
      %1793 = vmatpush2.bf16.msra.mxu0 0
      %1794 = vmatprep.mubr.bf16.mxu0 0
      %1795 = vmatmul.mubr.bf16.gmra.mxu0 %v1760
      %v1796 = vpop.f32.mrf.mxu0
      %v1797 = vadd.f32 0.0, %v1796
      %v1798 = vpop.f32.mrf.mxu0
      %v1799 = vpop.f32.mrf.mxu0
      %v1800 = vadd.f32 0.0, %v1799
      %v1801 = vpop.f32.mrf.mxu0
      %1802 = vdwg.mxu0
      %v1803 = vadd.f32 %v1741, %v1797
      %v1804 = vadd.f32 %v1742, %v1800
      %v1805 = vld [vmem:[%s5] sm:$0x1]
      %v1807 = vlaneseq
      %v1808 = vshrl.u32 %v1807, 7
      %v1809 = vsub.s32 0, %v1808
      %v1810 = vrot.slane %v1805, %v1809
      %v1812 = vadd.f32 %v1803, %v1810
      %v1813 = vadd.f32 %v1804, %v1810
      %vm1814 = vcmp.gt.f32.partialorder %v1812, 0.0
      %vm1815 = vcmp.gt.f32.partialorder %v1813, 0.0
      %v1816 = vmul.f32 %v1812, 0.2
      %v1817 = vmul.f32 %v1813, 0.2
      %v1818 = vsel %vm1814, %v1812, %v1816
      %v1819 = vsel %vm1815, %v1813, %v1817
      %v1820 = vld [vmem:[%s6] sm:$0xff]
      %v1821 = vld [vmem:[%s6 + $0x8] sm:$0xff]
      %v1822 = vmul.f32 %v1818, %v1820
      %v1823 = vmul.f32 %v1819, %v1821
      %v1824 = vadd.f32 %v1822, %v1823
      %v1825 = vrot.slane %v1824, 4
      %v1826 = vadd.f32 %v1824, %v1825
      %v1827 = vrot.slane %v1826, 2
      %v1828 = vadd.f32 %v1826, %v1827
      %v1829 = vrot.slane %v1828, 1
      %v1830 = vadd.f32 %v1828, %v1829
      %1831 = vadd.xlane.f32.xlu0 %v1830
      %v1832 = vpop.xlane.xlu0 %1831
      %s1833 = sld [smem:[#allocation2]]
      %v1834 = vstv %s1833
      %v1835 = vadd.f32 %v1832, %v1834
      %v1836 = vsub.f32 0.0, %v1835
      %v1837 = vmul.f32 %v1836, 1.442695
      %v1838 = vpow.pop %v1837
      %v1839 = vadd.f32 %v1838, 1.0
      %v1840 = vrcp.pop %v1839
      %1841 = vst [vmem:[%s304] sm:$0x1] %v1840
      %p1842 = scmp.lt.s32.totalorder %s20, 1
      %s1843 = scalar_select %p1842, %s20, 1
      %s1844 = scalar_lea.vmem %s8, %s1843
      // Predicated region
      $region53: #{_forward_impl.1} parent=51 // pred_check
        %p1845 = pneg %p211
      $region54: #{_forward_impl.1} parent=51 // pred_check_branch
        %1847 = sbr.rel (%p1845) target = $region56
      $region55: #{_forward_impl.1} parent=51 // pred_region
        _
      $region56: #{_forward_impl.1} parent=51 // pred_fallthru
        _
    $region52: #{_forward_impl.1} parent=5 // pred_fallthru
      _
    %p1848 = scmp.le.s32.totalorder 2, %s15
    // Predicated region
    $region57: #{_forward_impl.1} parent=5 // pred_check
      %p1849 = pneg %p1848
    $region58: #{_forward_impl.1} parent=5 // pred_check_branch
      %1851 = sbr.rel (%p1849) target = $region60
    $region59: #{_forward_impl.1} parent=5 // pred_region
      %s1852 = ssub.s32 %s15, 2
      // Predicated region
      $region61: #{_forward_impl.1} parent=59 // pred_check
        %p1853 = pneg %p217
      $region62: #{_forward_impl.1} parent=59 // pred_check_branch
        %1855 = sbr.rel (%p1853) target = $region64
      $region63: #{_forward_impl.1} parent=59 // pred_region
        %p1856 = scmp.lt.s32.totalorder %s21, 1
        %s1857 = scalar_select %p1856, %s21, 1
        %s1858 = scalar_lea.vmem %s8, %s1857
      $region64: #{_forward_impl.1} parent=59 // pred_fallthru
        _
    $region60: #{_forward_impl.1} parent=5 // pred_fallthru
      _
  $region6: #{_forward_impl.1} parent=0 // loop_footer
    %s19 = sadd.s32 1, %s15
  $region7: #{_forward_impl.1} parent=0 // loop_footer_branch
    %14 = sbr.rel target = $region3
  $region8: #{_forward_impl.1} parent=0 // loop_exit
    _

</llo_original>
